<compile_context>
chip_gen: v5e
topology: v5e:2x2
jax: 0.10.0
libtpu: 0.0.40
codegen_flags: <defaults>
</compile_context>

<pallas_src>
import numpy as np
import jax
import jax.numpy as jnp
from jax.experimental import pallas as pl
from jax.experimental.pallas import tpu as pltpu


def fcnn1d_kernel(xw_ref, w0_ref, sh0_ref, w1_ref, sh1_ref, w2_ref, sh2_ref,
                  wl_ref, bl_ref, o_ref):
    L0, TN, KC = xw_ref.shape                  # (9, tile_n, 32) at test sizes
    C0 = w0_ref.shape[1]                       # 128
    K1 = w1_ref.shape[0] // C0                 # 5
    C1 = w1_ref.shape[1]                       # 256
    K2 = w2_ref.shape[0] // C1                 # 3
    L1 = L0 - K1 + 1
    L2 = L1 - K2 + 1
    mm_dt = w1_ref.dtype                       # bf16 operands for the MXU

    # conv block 0 (im2col'd in the wrapper, BN scale folded into w0): ONE matmul.
    # (L0, TN, KC) -> (L0*TN, KC) only collapses 8-aligned leading dims => free relayout.
    h0 = jnp.dot(xw_ref[...].reshape(L0 * TN, KC), w0_ref[...],
                 preferred_element_type=jnp.float32)
    h0 = jnp.maximum(h0 + sh0_ref[...], 0.0)                 # folded bias/BN shift + ReLU
    h0 = h0.reshape(L0, TN, C0).astype(mm_dt)                # (L0, TN, 128)

    # conv block 1 (ks=5, 128 -> 256): lane-concat the K1 shifted time slices into a
    # single K = K1*128 = 640 contraction -> one MXU matmul, no dependent VPU adds.
    h0c = jnp.concatenate([h0[k:k + L1] for k in range(K1)], axis=-1)   # (L1, TN, 640)
    h1 = jnp.dot(h0c.reshape(L1 * TN, K1 * C0), w1_ref[...],
                 preferred_element_type=jnp.float32)
    h1 = jnp.maximum(h1 + sh1_ref[...], 0.0)
    h1 = h1.reshape(L1, TN, C1).astype(mm_dt)                # (L1, TN, 256)

    # conv block 2 (ks=3, 256 -> 128): same trick, K = K2*256 = 768.
    h1c = jnp.concatenate([h1[k:k + L2] for k in range(K2)], axis=-1)   # (L2, TN, 768)
    h2 = jnp.dot(h1c.reshape(L2 * TN, K2 * C1), w2_ref[...],
                 preferred_element_type=jnp.float32)
    h2 = jnp.maximum(h2 + sh2_ref[...], 0.0)
    h2 = h2.reshape(L2, TN, -1).astype(mm_dt)                # (L2, TN, 128)

    # permute + AvgPool1d(2) + flatten + Linear: pool/flatten are pre-folded into wl,
    # so this is ONE (TN, L2*128) @ (L2*128, NC_pad) matmul plus the bias.
    h_lin = jnp.concatenate([h2[t] for t in range(L2)], axis=-1)        # (TN, L2*128)
    o_ref[...] = jnp.dot(h_lin, wl_ref[...],
                         preferred_element_type=jnp.float32) + bl_ref[...]


def init_params(key, c_in, seq_len, num_classes):
    """Deterministic synthetic parameters matching the PyTorch module's shapes."""
    ks = (8, 5, 3)
    chans = (c_in, 128, 256, 128)
    keys = jax.random.split(key, 16)
    p = {}
    ki = 0
    for i in range(3):
        cin, cout, k = chans[i], chans[i + 1], ks[i]
        bound = 1.0 / np.sqrt(cin * k)
        p[f'conv{i}_w'] = jax.random.uniform(keys[ki], (cout, cin, k),
                                             jnp.float32, -bound, bound); ki += 1
        p[f'conv{i}_b'] = jax.random.uniform(keys[ki], (cout,),
                                             jnp.float32, -bound, bound); ki += 1
        p[f'bn{i}_gamma'] = 1.0 + 0.1 * jax.random.normal(keys[ki], (cout,)); ki += 1
        p[f'bn{i}_beta'] = 0.1 * jax.random.normal(keys[ki], (cout,)); ki += 1
        # deterministic "running" stats for eval-mode BatchNorm
        p[f'bn{i}_mean'] = 0.05 * jnp.cos(jnp.arange(cout, dtype=jnp.float32))
        p[f'bn{i}_var'] = 1.0 + 0.1 * jnp.sin(jnp.arange(cout, dtype=jnp.float32)) ** 2
    in_f = (seq_len - 13) * 64
    bound = 1.0 / np.sqrt(in_f)
    p['lin_w'] = jax.random.uniform(keys[ki], (num_classes, in_f),
                                    jnp.float32, -bound, bound); ki += 1
    p['lin_b'] = jax.random.uniform(keys[ki], (num_classes,),
                                    jnp.float32, -bound, bound); ki += 1
    return p


def prepare_params(p, eps=1e-5, mm_dtype=jnp.bfloat16):
    """ONE-TIME weight preprocessing (hoisted out of the per-call path):
       - fold eval-mode BN scale into conv weights (f32 multiply, then bf16 cast),
       - fold conv bias + BN shift into per-channel f32 shifts,
       - repack conv1/conv2 taps into single big-K matmul weights,
       - fold AvgPool1d(2) + flatten into the linear weight, pad classes to 128 lanes."""
    K0, K1, K2 = 8, 5, 3
    c_in = p['conv0_w'].shape[1]
    prep = {}

    scales, shifts = [], []
    for i in range(3):
        scale = p[f'bn{i}_gamma'] / jnp.sqrt(p[f'bn{i}_var'] + eps)
        shift = (p[f'conv{i}_b'] - p[f'bn{i}_mean']) * scale + p[f'bn{i}_beta']
        scales.append(scale)
        shifts.append(shift)

    # conv weights -> channels-last, BN scale folded in f32 BEFORE the bf16 cast
    w0 = jnp.transpose(p['conv0_w'], (2, 1, 0)) * scales[0]        # (K0, Cin, 128)
    w1 = jnp.transpose(p['conv1_w'], (2, 1, 0)) * scales[1]        # (K1, 128, 256)
    w2 = jnp.transpose(p['conv2_w'], (2, 1, 0)) * scales[2]        # (K2, 256, 128)
    prep['w0'] = w0.reshape(K0 * c_in, 128).astype(mm_dtype)       # im2col'd conv0
    prep['w1'] = w1.reshape(K1 * 128, 256).astype(mm_dtype)        # big-K conv1 (640,256)
    prep['w2'] = w2.reshape(K2 * 256, 128).astype(mm_dtype)        # big-K conv2 (768,128)
    prep['sh0'] = shifts[0].reshape(1, 128).astype(jnp.float32)
    prep['sh1'] = shifts[1].reshape(1, 256).astype(jnp.float32)
    prep['sh2'] = shifts[2].reshape(1, 128).astype(jnp.float32)

    # fold AvgPool1d(2) (over the post-permute channel axis) + flatten into linear weight
    NC, in_f = p['lin_w'].shape
    L2 = in_f // 64
    pool_np = np.zeros((128, 64), np.float32)
    pool_np[2 * np.arange(64), np.arange(64)] = 0.5
    pool_np[2 * np.arange(64) + 1, np.arange(64)] = 0.5
    wl_t = jnp.transpose(p['lin_w'], (1, 0)).reshape(L2, 64, NC)   # (L2, 64, NC)
    wl = jnp.einsum('pc,tcn->tpn', jnp.asarray(pool_np), wl_t)     # (L2, 128, NC)
    NC_pad = ((NC + 127) // 128) * 128
    wl = jnp.pad(wl, ((0, 0), (0, 0), (0, NC_pad - NC)))
    prep['wl'] = wl.reshape(L2 * 128, NC_pad).astype(mm_dtype)     # (L2*128, NC_pad)
    prep['bl'] = jnp.pad(p['lin_b'].reshape(1, NC),
                         ((0, 0), (0, NC_pad - NC))).astype(jnp.float32)
    return prep


def fcnn1d_pallas(x_ncl, prep, *, num_classes):
    """Per-call path: input im2col + batch padding + one fused pallas_call."""
    N, c_in, L = x_ncl.shape
    K0 = 8
    L0 = L - K0 + 1
    KC = K0 * c_in
    NC_pad = prep['wl'].shape[1]
    mm_dtype = prep['w0'].dtype

    # --- input prep: NCL -> time-major (L0, NP, K0*Cin) im2col ---
    # TODO(synk): for large L, build these windows inside the kernel from a packed
    # time-major x (cuts input HBM bytes ~K0x); negligible at L=16.
    x_nlc = jnp.transpose(x_ncl, (0, 2, 1)).astype(jnp.float32)            # (N, L, Cin)
    x_win = jnp.stack([x_nlc[:, k:k + L0, :] for k in range(K0)], axis=2)  # (N,L0,K0,Cin)
    x_win = x_win.reshape(N, L0, KC).transpose(1, 0, 2)                    # (L0, N, KC)

    # pad the batch so it is sublane-aligned and divisible by the batch tile
    TILE_N = 256
    NP = max(8, ((N + 7) // 8) * 8)
    if NP > TILE_N:
        NP = ((NP + TILE_N - 1) // TILE_N) * TILE_N
        tile_n = TILE_N
    else:
        tile_n = NP
    if NP != N:
        x_win = jnp.pad(x_win, ((0, 0), (0, NP - N), (0, 0)))
    x_win = x_win.astype(mm_dtype)

    const2 = lambda b: (0, 0)
    out = pl.pallas_call(
        fcnn1d_kernel,
        out_shape=jax.ShapeDtypeStruct((NP, NC_pad), jnp.float32),
        grid=(NP // tile_n,),
        in_specs=[
            pl.BlockSpec((L0, tile_n, KC), lambda b: (0, b, 0)),   # batch-tiled input
            pl.BlockSpec(prep['w0'].shape, const2),                # weights: VMEM-resident
            pl.BlockSpec(prep['sh0'].shape, const2),
            pl.BlockSpec(prep['w1'].shape, const2),
            pl.BlockSpec(prep['sh1'].shape, const2),
            pl.BlockSpec(prep['w2'].shape, const2),
            pl.BlockSpec(prep['sh2'].shape, const2),
            pl.BlockSpec(prep['wl'].shape, const2),
            pl.BlockSpec(prep['bl'].shape, const2),
        ],
        out_specs=pl.BlockSpec((tile_n, NC_pad), lambda b: (b, 0)),  # lane-dense slab
        compiler_params=pltpu.CompilerParams(dimension_semantics=("parallel",)),
    )(x_win, prep['w0'], prep['sh0'], prep['w1'], prep['sh1'],
      prep['w2'], prep['sh2'], prep['wl'], prep['bl'])
    return out[:N, :num_classes]


def fcnn1d_reference(x_ncl, p):
    """Pure-JAX f32 reference mirroring the PyTorch forward (eval mode)."""
    eps = 1e-5

    def block(x, i):
        y = jax.lax.conv_general_dilated(x, p[f'conv{i}_w'], (1,), 'VALID',
                                         dimension_numbers=('NCH', 'OIH', 'NCH'))
        y = y + p[f'conv{i}_b'][None, :, None]
        scale = p[f'bn{i}_gamma'] / jnp.sqrt(p[f'bn{i}_var'] + eps)
        shift = p[f'bn{i}_beta'] - p[f'bn{i}_mean'] * scale
        return jnp.maximum(y * scale[None, :, None] + shift[None, :, None], 0.0)

    out = x_ncl
    for i in range(3):
        out = block(out, i)
    out = jnp.transpose(out, (0, 2, 1))                    # (N, L2, 128)
    N, L2, C = out.shape
    out = out.reshape(N, L2, C // 2, 2).mean(-1)           # AvgPool1d(2)
    out = out.reshape(N, L2 * (C // 2))
    return out @ p['lin_w'].T + p['lin_b']


if __name__ == "__main__":
    key = jax.random.PRNGKey(0)
    kx, kp = jax.random.split(key)
    # params['input_shape'] = (C_IN, L); params['num_output_classes'] = NC
    N, C_IN, L, NC = 2, 4, 16, 10
    x = jax.random.normal(kx, (N, C_IN, L), jnp.float32)
    p = init_params(kp, C_IN, L, NC)

    prep = prepare_params(p)                       # one-time weight preprocessing
    run = jax.jit(fcnn1d_pallas, static_argnames=('num_classes',))
    out = jax.block_until_ready(run(x, prep, num_classes=NC))
    ref = jax.block_until_ready(fcnn1d_reference(x, p))

    assert out.shape == (N, NC)
    # bf16 MXU operands with f32 accumulation => slightly looser tolerance than pure f32
    np.testing.assert_allclose(np.asarray(out), np.asarray(ref), atol=2e-2, rtol=2e-2)
    print("KERNEL_OK")
</pallas_src>

<mosaic_0001>
module attributes {stable_mosaic.version = 11 : i64} {
  func.func @fcnn1d_kernel(%arg0: i32, %arg1: memref<9x8x32xbf16, #tpu.memory_space<vmem>>, %arg2: memref<32x128xbf16, #tpu.memory_space<vmem>>, %arg3: memref<1x128xf32, #tpu.memory_space<vmem>>, %arg4: memref<640x256xbf16, #tpu.memory_space<vmem>>, %arg5: memref<1x256xf32, #tpu.memory_space<vmem>>, %arg6: memref<768x128xbf16, #tpu.memory_space<vmem>>, %arg7: memref<1x128xf32, #tpu.memory_space<vmem>>, %arg8: memref<384x128xbf16, #tpu.memory_space<vmem>>, %arg9: memref<1x128xf32, #tpu.memory_space<vmem>>, %arg10: memref<8x128xf32, #tpu.memory_space<vmem>>) attributes {dimension_semantics = [#tpu.dimension_semantics<parallel>], iteration_bounds = array<i64: 1>, scalar_prefetch = 0 : i64, scratch_operands = 0 : i64, tpu.core_type = #tpu.core_type<tc>, window_params = [{transform_indices = @transform_0, window_bounds = array<i64: 9, 8, 32>}, {pipeline_mode = #tpu.pipeline_mode<synchronous>, transform_indices = @transform_1, window_bounds = array<i64: 32, 128>}, {pipeline_mode = #tpu.pipeline_mode<synchronous>, transform_indices = @transform_2, window_bounds = array<i64: 1, 128>}, {pipeline_mode = #tpu.pipeline_mode<synchronous>, transform_indices = @transform_3, window_bounds = array<i64: 640, 256>}, {pipeline_mode = #tpu.pipeline_mode<synchronous>, transform_indices = @transform_4, window_bounds = array<i64: 1, 256>}, {pipeline_mode = #tpu.pipeline_mode<synchronous>, transform_indices = @transform_5, window_bounds = array<i64: 768, 128>}, {pipeline_mode = #tpu.pipeline_mode<synchronous>, transform_indices = @transform_6, window_bounds = array<i64: 1, 128>}, {pipeline_mode = #tpu.pipeline_mode<synchronous>, transform_indices = @transform_7, window_bounds = array<i64: 384, 128>}, {pipeline_mode = #tpu.pipeline_mode<synchronous>, transform_indices = @transform_8, window_bounds = array<i64: 1, 128>}, {transform_indices = @transform_9, window_bounds = array<i64: 8, 128>}]} {
    %c0 = arith.constant 0 : index
    %c0_0 = arith.constant 0 : index
    %c0_1 = arith.constant 0 : index
    %0 = vector.load %arg1[%c0, %c0_0, %c0_1] : memref<9x8x32xbf16, #tpu.memory_space<vmem>>, vector<9x8x32xbf16>
    %1 = vector.shape_cast %0 : vector<9x8x32xbf16> to vector<72x32xbf16>
    %c0_2 = arith.constant 0 : index
    %c0_3 = arith.constant 0 : index
    %2 = vector.load %arg2[%c0_2, %c0_3] : memref<32x128xbf16, #tpu.memory_space<vmem>>, vector<32x128xbf16>
    %cst = arith.constant dense<0.000000e+00> : vector<72x128xf32>
    %3 = tpu.matmul %1, %2, %cst {dimension_numbers = #tpu.dot_dimension_numbers<[1], [0], [0], [1], [0, 0, 1, 1], [], []>} : vector<72x32xbf16>, vector<32x128xbf16>, vector<72x128xf32> -> vector<72x128xf32>
    %c0_4 = arith.constant 0 : index
    %c0_5 = arith.constant 0 : index
    %4 = vector.load %arg3[%c0_4, %c0_5] : memref<1x128xf32, #tpu.memory_space<vmem>>, vector<1x128xf32>
    %5 = vector.broadcast %4 : vector<1x128xf32> to vector<72x128xf32>
    %6 = arith.addf %3, %5 : vector<72x128xf32>
    %cst_6 = arith.constant 0.000000e+00 : f32
    %7 = vector.broadcast %cst_6 : f32 to vector<72x128xf32>
    %8 = arith.maximumf %6, %7 : vector<72x128xf32>
    %9 = vector.shape_cast %8 : vector<72x128xf32> to vector<9x8x128xf32>
    %10 = arith.truncf %9 : vector<9x8x128xf32> to vector<9x8x128xbf16>
    %11 = vector.extract_strided_slice %10 {offsets = [0, 0, 0], sizes = [5, 8, 128], strides = [1, 1, 1]} : vector<9x8x128xbf16> to vector<5x8x128xbf16>
    %12 = vector.extract_strided_slice %10 {offsets = [1, 0, 0], sizes = [5, 8, 128], strides = [1, 1, 1]} : vector<9x8x128xbf16> to vector<5x8x128xbf16>
    %13 = vector.extract_strided_slice %10 {offsets = [2, 0, 0], sizes = [5, 8, 128], strides = [1, 1, 1]} : vector<9x8x128xbf16> to vector<5x8x128xbf16>
    %14 = vector.extract_strided_slice %10 {offsets = [3, 0, 0], sizes = [5, 8, 128], strides = [1, 1, 1]} : vector<9x8x128xbf16> to vector<5x8x128xbf16>
    %15 = vector.extract_strided_slice %10 {offsets = [4, 0, 0], sizes = [5, 8, 128], strides = [1, 1, 1]} : vector<9x8x128xbf16> to vector<5x8x128xbf16>
    %16 = tpu.concatenate %11, %12, %13, %14, %15 in 2 : vector<5x8x128xbf16>, vector<5x8x128xbf16>, vector<5x8x128xbf16>, vector<5x8x128xbf16>, vector<5x8x128xbf16> -> vector<5x8x640xbf16>
    %17 = vector.shape_cast %16 : vector<5x8x640xbf16> to vector<40x640xbf16>
    %c0_7 = arith.constant 0 : index
    %c0_8 = arith.constant 0 : index
    %18 = vector.load %arg4[%c0_7, %c0_8] : memref<640x256xbf16, #tpu.memory_space<vmem>>, vector<640x256xbf16>
    %cst_9 = arith.constant dense<0.000000e+00> : vector<40x256xf32>
    %19 = tpu.matmul %17, %18, %cst_9 {dimension_numbers = #tpu.dot_dimension_numbers<[1], [0], [0], [1], [0, 0, 1, 1], [], []>} : vector<40x640xbf16>, vector<640x256xbf16>, vector<40x256xf32> -> vector<40x256xf32>
    %c0_10 = arith.constant 0 : index
    %c0_11 = arith.constant 0 : index
    %20 = vector.load %arg5[%c0_10, %c0_11] : memref<1x256xf32, #tpu.memory_space<vmem>>, vector<1x256xf32>
    %21 = vector.broadcast %20 : vector<1x256xf32> to vector<40x256xf32>
    %22 = arith.addf %19, %21 : vector<40x256xf32>
    %cst_12 = arith.constant 0.000000e+00 : f32
    %23 = vector.broadcast %cst_12 : f32 to vector<40x256xf32>
    %24 = arith.maximumf %22, %23 : vector<40x256xf32>
    %25 = vector.shape_cast %24 : vector<40x256xf32> to vector<5x8x256xf32>
    %26 = arith.truncf %25 : vector<5x8x256xf32> to vector<5x8x256xbf16>
    %27 = vector.extract_strided_slice %26 {offsets = [0, 0, 0], sizes = [3, 8, 256], strides = [1, 1, 1]} : vector<5x8x256xbf16> to vector<3x8x256xbf16>
    %28 = vector.extract_strided_slice %26 {offsets = [1, 0, 0], sizes = [3, 8, 256], strides = [1, 1, 1]} : vector<5x8x256xbf16> to vector<3x8x256xbf16>
    %29 = vector.extract_strided_slice %26 {offsets = [2, 0, 0], sizes = [3, 8, 256], strides = [1, 1, 1]} : vector<5x8x256xbf16> to vector<3x8x256xbf16>
    %30 = tpu.concatenate %27, %28, %29 in 2 : vector<3x8x256xbf16>, vector<3x8x256xbf16>, vector<3x8x256xbf16> -> vector<3x8x768xbf16>
    %31 = vector.shape_cast %30 : vector<3x8x768xbf16> to vector<24x768xbf16>
    %c0_13 = arith.constant 0 : index
    %c0_14 = arith.constant 0 : index
    %32 = vector.load %arg6[%c0_13, %c0_14] : memref<768x128xbf16, #tpu.memory_space<vmem>>, vector<768x128xbf16>
    %cst_15 = arith.constant dense<0.000000e+00> : vector<24x128xf32>
    %33 = tpu.matmul %31, %32, %cst_15 {dimension_numbers = #tpu.dot_dimension_numbers<[1], [0], [0], [1], [0, 0, 1, 1], [], []>} : vector<24x768xbf16>, vector<768x128xbf16>, vector<24x128xf32> -> vector<24x128xf32>
    %c0_16 = arith.constant 0 : index
    %c0_17 = arith.constant 0 : index
    %34 = vector.load %arg7[%c0_16, %c0_17] : memref<1x128xf32, #tpu.memory_space<vmem>>, vector<1x128xf32>
    %35 = vector.broadcast %34 : vector<1x128xf32> to vector<24x128xf32>
    %36 = arith.addf %33, %35 : vector<24x128xf32>
    %cst_18 = arith.constant 0.000000e+00 : f32
    %37 = vector.broadcast %cst_18 : f32 to vector<24x128xf32>
    %38 = arith.maximumf %36, %37 : vector<24x128xf32>
    %39 = vector.shape_cast %38 : vector<24x128xf32> to vector<3x8x128xf32>
    %40 = arith.truncf %39 : vector<3x8x128xf32> to vector<3x8x128xbf16>
    %41 = vector.extract_strided_slice %40 {offsets = [0, 0, 0], sizes = [1, 8, 128], strides = [1, 1, 1]} : vector<3x8x128xbf16> to vector<1x8x128xbf16>
    %42 = vector.shape_cast %41 : vector<1x8x128xbf16> to vector<8x128xbf16>
    %43 = vector.extract_strided_slice %40 {offsets = [1, 0, 0], sizes = [1, 8, 128], strides = [1, 1, 1]} : vector<3x8x128xbf16> to vector<1x8x128xbf16>
    %44 = vector.shape_cast %43 : vector<1x8x128xbf16> to vector<8x128xbf16>
    %45 = vector.extract_strided_slice %40 {offsets = [2, 0, 0], sizes = [1, 8, 128], strides = [1, 1, 1]} : vector<3x8x128xbf16> to vector<1x8x128xbf16>
    %46 = vector.shape_cast %45 : vector<1x8x128xbf16> to vector<8x128xbf16>
    %47 = tpu.concatenate %42, %44, %46 in 1 : vector<8x128xbf16>, vector<8x128xbf16>, vector<8x128xbf16> -> vector<8x384xbf16>
    %c0_19 = arith.constant 0 : index
    %c0_20 = arith.constant 0 : index
    %48 = vector.load %arg8[%c0_19, %c0_20] : memref<384x128xbf16, #tpu.memory_space<vmem>>, vector<384x128xbf16>
    %cst_21 = arith.constant dense<0.000000e+00> : vector<8x128xf32>
    %49 = tpu.matmul %47, %48, %cst_21 {dimension_numbers = #tpu.dot_dimension_numbers<[1], [0], [0], [1], [0, 0, 1, 1], [], []>} : vector<8x384xbf16>, vector<384x128xbf16>, vector<8x128xf32> -> vector<8x128xf32>
    %c0_22 = arith.constant 0 : index
    %c0_23 = arith.constant 0 : index
    %50 = vector.load %arg9[%c0_22, %c0_23] : memref<1x128xf32, #tpu.memory_space<vmem>>, vector<1x128xf32>
    %51 = vector.broadcast %50 : vector<1x128xf32> to vector<8x128xf32>
    %52 = arith.addf %49, %51 : vector<8x128xf32>
    %c0_24 = arith.constant 0 : index
    %c0_25 = arith.constant 0 : index
    %53 = vector.load %arg10[%c0_24, %c0_25] : memref<8x128xf32, #tpu.memory_space<vmem>>, vector<8x128xf32>
    tpu.vector_store %arg10[%c0_24, %c0_25], %52 {strides = array<i32>} : memref<8x128xf32, #tpu.memory_space<vmem>>, vector<8x128xf32>,
    return
  }
  func.func @transform_0(%arg0: i32) -> (i32, i32, i32) {
    %c0_i32 = arith.constant 0 : i32
    %c0_i32_0 = arith.constant 0 : i32
    %c0_i32_1 = arith.constant 0 : i32
    return %c0_i32, %arg0, %c0_i32_0 : i32, i32, i32
  }
  func.func @transform_1(%arg0: i32) -> (i32, i32) {
    %c0_i32 = arith.constant 0 : i32
    %c0_i32_0 = arith.constant 0 : i32
    %c0_i32_1 = arith.constant 0 : i32
    return %c0_i32, %c0_i32_0 : i32, i32
  }
  func.func @transform_2(%arg0: i32) -> (i32, i32) {
    %c0_i32 = arith.constant 0 : i32
    %c0_i32_0 = arith.constant 0 : i32
    %c0_i32_1 = arith.constant 0 : i32
    return %c0_i32, %c0_i32_0 : i32, i32
  }
  func.func @transform_3(%arg0: i32) -> (i32, i32) {
    %c0_i32 = arith.constant 0 : i32
    %c0_i32_0 = arith.constant 0 : i32
    %c0_i32_1 = arith.constant 0 : i32
    return %c0_i32, %c0_i32_0 : i32, i32
  }
  func.func @transform_4(%arg0: i32) -> (i32, i32) {
    %c0_i32 = arith.constant 0 : i32
    %c0_i32_0 = arith.constant 0 : i32
    %c0_i32_1 = arith.constant 0 : i32
    return %c0_i32, %c0_i32_0 : i32, i32
  }
  func.func @transform_5(%arg0: i32) -> (i32, i32) {
    %c0_i32 = arith.constant 0 : i32
    %c0_i32_0 = arith.constant 0 : i32
    %c0_i32_1 = arith.constant 0 : i32
    return %c0_i32, %c0_i32_0 : i32, i32
  }
  func.func @transform_6(%arg0: i32) -> (i32, i32) {
    %c0_i32 = arith.constant 0 : i32
    %c0_i32_0 = arith.constant 0 : i32
    %c0_i32_1 = arith.constant 0 : i32
    return %c0_i32, %c0_i32_0 : i32, i32
  }
  func.func @transform_7(%arg0: i32) -> (i32, i32) {
    %c0_i32 = arith.constant 0 : i32
    %c0_i32_0 = arith.constant 0 : i32
    %c0_i32_1 = arith.constant 0 : i32
    return %c0_i32, %c0_i32_0 : i32, i32
  }
  func.func @transform_8(%arg0: i32) -> (i32, i32) {
    %c0_i32 = arith.constant 0 : i32
    %c0_i32_0 = arith.constant 0 : i32
    %c0_i32_1 = arith.constant 0 : i32
    return %c0_i32, %c0_i32_0 : i32, i32
  }
  func.func @transform_9(%arg0: i32) -> (i32, i32) {
    %c0_i32 = arith.constant 0 : i32
    %c0_i32_0 = arith.constant 0 : i32
    return %arg0, %c0_i32 : i32, i32
  }
}

</mosaic_0001>

<llo_original>
// kernel: fcnn1d_pallas.1
$region0: #{fcnn1d_pallas.1}
  #allocation0 [shape = 'u32[]', space=smem, size = 0x4, offset = 0x4, fixed_abs, tag = 'smem constant byte address 0x4 - core index']
  #allocation1 [shape = 'u32[72,128]{1,0:T(1,128)}', space=vmem, size = 0x9000, scoped, tag = 'internal scratch']
  %s0 = inlined_call_operand.vmem [shape: bf16[9,8,32], index: 0, kind: input, shape index: {}]
  %s1 = inlined_call_operand.vmem [shape: bf16[32,128], index: 1, kind: input, shape index: {}]
  %s2 = inlined_call_operand.vmem [shape: f32[1,128], index: 2, kind: input, shape index: {}]
  %s3 = inlined_call_operand.hbm [shape: bf16[640,256], index: 3, kind: input, shape index: {}]
  %s4 = inlined_call_operand.vmem [shape: f32[1,256], index: 4, kind: input, shape index: {}]
  %s5 = inlined_call_operand.hbm [shape: bf16[768,128], index: 5, kind: input, shape index: {}]
  %s6 = inlined_call_operand.vmem [shape: f32[1,128], index: 6, kind: input, shape index: {}]
  %s7 = inlined_call_operand.hbm [shape: bf16[384,128], index: 7, kind: input, shape index: {}]
  %s8 = inlined_call_operand.vmem [shape: f32[1,128], index: 8, kind: input, shape index: {}]
  %s9 = inlined_call_operand.vmem [shape: f32[8,128], index: 9, kind: output, shape index: {}]
  %s10 = sld [smem:[#allocation0]]
  $region58: #{fcnn1d_pallas.1} parent=0
    _
  %s12 = ssub.s32 1, %s10
  %s13 = scalar_select 0, %s12, %s10
  $region1: #{fcnn1d_pallas.1} parent=0
    #allocation2 [shape = 'u8[327680]{0}', space=vmem, size = 0x50000, scoped, tag = 'input window, operand 3, single buffered']
    #allocation3 [shape = 's32[1]{0}', space=sflag, size = 0x4, scoped, tag = 'scoped memory for fcnn1d_pallas.1']
    #allocation4 [shape = 'u8[196608]{0}', space=vmem, size = 0x30000, scoped, tag = 'input window, operand 5, single buffered']
    #allocation5 [shape = 's32[1]{0}', space=sflag, size = 0x4, scoped, tag = 'scoped memory for fcnn1d_pallas.1']
    #allocation6 [shape = 'u8[98304]{0}', space=vmem, size = 0x18000, scoped, tag = 'input window, operand 7, single buffered']
    %14 = vsyncpa [#allocation3], 0
    %15 = vsyncpa [#allocation5], 0
    // Predicated region
    $region2: #{fcnn1d_pallas.1} parent=1 // pred_check
      _
    $region3: #{fcnn1d_pallas.1} parent=1 // pred_check_branch
      %17 = sbr.rel (0) target = $region5
    $region4: #{fcnn1d_pallas.1} parent=1 // pred_region
      _
    $region5: #{fcnn1d_pallas.1} parent=1 // pred_fallthru
      _
    // Predicated region
    $region6: #{fcnn1d_pallas.1} parent=1 // pred_check
      _
    $region7: #{fcnn1d_pallas.1} parent=1 // pred_check_branch
      %19 = sbr.rel (0) target = $region9
    $region8: #{fcnn1d_pallas.1} parent=1 // pred_region
      _
    $region9: #{fcnn1d_pallas.1} parent=1 // pred_fallthru
      _
    // Predicated region
    $region10: #{fcnn1d_pallas.1} parent=1 // pred_check
      _
    $region11: #{fcnn1d_pallas.1} parent=1 // pred_check_branch
      %21 = sbr.rel (0) target = $region13
    $region12: #{fcnn1d_pallas.1} parent=1 // pred_region
      _
    $region13: #{fcnn1d_pallas.1} parent=1 // pred_fallthru
      _
    // Predicated region
    $region14: #{fcnn1d_pallas.1} parent=1 // pred_check
      _
    $region15: #{fcnn1d_pallas.1} parent=1 // pred_check_branch
      %23 = sbr.rel (0) target = $region17
    $region16: #{fcnn1d_pallas.1} parent=1 // pred_region
      %25 = vsyncadd [#allocation3], 0
      %s26 = sshll.u32 %s3, 4
      %s27 = int_to_ptr.hbm [resolvable:$true] %s26
      %s28 = sshll.u32 [#allocation2], 4
      %s29 = int_to_ptr.vmem [resolvable:$true] %s28
      %34 = dma.hbm_to_vmem [thread:$0]  %s27, 10240, %s29, [#allocation3], 128, 128, 8
    $region17: #{fcnn1d_pallas.1} parent=1 // pred_fallthru
      _
    // Predicated region
    $region18: #{fcnn1d_pallas.1} parent=1 // pred_check
      _
    $region19: #{fcnn1d_pallas.1} parent=1 // pred_check_branch
      %36 = sbr.rel (0) target = $region21
    $region20: #{fcnn1d_pallas.1} parent=1 // pred_region
      _
    $region21: #{fcnn1d_pallas.1} parent=1 // pred_fallthru
      _
    // Predicated region
    $region22: #{fcnn1d_pallas.1} parent=1 // pred_check
      _
    $region23: #{fcnn1d_pallas.1} parent=1 // pred_check_branch
      %38 = sbr.rel (0) target = $region25
    $region24: #{fcnn1d_pallas.1} parent=1 // pred_region
      %40 = vsyncadd [#allocation5], 0
      %s41 = sshll.u32 %s5, 4
      %s42 = int_to_ptr.hbm [resolvable:$true] %s41
      %s43 = sshll.u32 [#allocation4], 4
      %s44 = int_to_ptr.vmem [resolvable:$true] %s43
      %49 = dma.hbm_to_vmem [thread:$0]  %s42, 6144, %s44, [#allocation5], 64, 64, 4
    $region25: #{fcnn1d_pallas.1} parent=1 // pred_fallthru
      _
    // Predicated region
    $region26: #{fcnn1d_pallas.1} parent=1 // pred_check
      _
    $region27: #{fcnn1d_pallas.1} parent=1 // pred_check_branch
      %51 = sbr.rel (0) target = $region29
    $region28: #{fcnn1d_pallas.1} parent=1 // pred_region
      _
    $region29: #{fcnn1d_pallas.1} parent=1 // pred_fallthru
      _
    // Predicated region
    $region30: #{fcnn1d_pallas.1} parent=1 // pred_check
      _
    $region31: #{fcnn1d_pallas.1} parent=1 // pred_check_branch
      %53 = sbr.rel (0) target = $region33
    $region32: #{fcnn1d_pallas.1} parent=1 // pred_region
      %55 = vsyncadd [#allocation5], 0
      %s56 = sshll.u32 %s7, 4
      %s57 = int_to_ptr.hbm [resolvable:$true] %s56
      %s58 = sshll.u32 [#allocation6], 4
      %s59 = int_to_ptr.vmem [resolvable:$true] %s58
      %64 = dma.hbm_to_vmem [thread:$0]  %s57, 3072, %s59, [#allocation5], 64, 64, 4
    $region33: #{fcnn1d_pallas.1} parent=1 // pred_fallthru
      _
    // Predicated region
    $region34: #{fcnn1d_pallas.1} parent=1 // pred_check
      _
    $region35: #{fcnn1d_pallas.1} parent=1 // pred_check_branch
      %66 = sbr.rel (0) target = $region37
    $region36: #{fcnn1d_pallas.1} parent=1 // pred_region
      _
    $region37: #{fcnn1d_pallas.1} parent=1 // pred_fallthru
      _
    // Predicated region
    $region38: #{fcnn1d_pallas.1} parent=1 // pred_check
      _
    $region39: #{fcnn1d_pallas.1} parent=1 // pred_check_branch
      %68 = sbr.rel (0) target = $region41
    $region40: #{fcnn1d_pallas.1} parent=1 // pred_region
      %70 = dma.done [#allocation3], 10240
    $region41: #{fcnn1d_pallas.1} parent=1 // pred_fallthru
      _
    // Predicated region
    $region42: #{fcnn1d_pallas.1} parent=1 // pred_check
      _
    $region43: #{fcnn1d_pallas.1} parent=1 // pred_check_branch
      %72 = sbr.rel (0) target = $region45
    $region44: #{fcnn1d_pallas.1} parent=1 // pred_region
      %74 = dma.done [#allocation5], 6144
    $region45: #{fcnn1d_pallas.1} parent=1 // pred_fallthru
      _
    // Predicated region
    $region46: #{fcnn1d_pallas.1} parent=1 // pred_check
      _
    $region47: #{fcnn1d_pallas.1} parent=1 // pred_check_branch
      %76 = sbr.rel (0) target = $region49
    $region48: #{fcnn1d_pallas.1} parent=1 // pred_region
      %78 = dma.done [#allocation5], 3072
    $region49: #{fcnn1d_pallas.1} parent=1 // pred_fallthru
      _
    %v80 = vld [vmem:[%s0] sm:$0xf]
    %v81 = vld [vmem:[%s0 + $0x4] sm:$0xf]
    %v82 = vld [vmem:[%s0 + $0x8] sm:$0xf]
    %v83 = vld [vmem:[%s0 + $0xc] sm:$0xf]
    %v84 = vld [vmem:[%s0 + $0x10] sm:$0xf]
    %v85 = vld [vmem:[%s0 + $0x14] sm:$0xf]
    %v86 = vld [vmem:[%s0 + $0x18] sm:$0xf]
    %v87 = vld [vmem:[%s0 + $0x1c] sm:$0xf]
    %v88 = vld [vmem:[%s0 + $0x20] sm:$0xf]
    %v89 = vld [vmem:[%s1] sm:$0xf]
    %v90 = vld [vmem:[%s1 + $0x4] sm:$0xf]
    %v91 = vld [vmem:[%s1 + $0x8] sm:$0xf]
    %v92 = vld [vmem:[%s1 + $0xc] sm:$0xf]
    %v93 = vld [vmem:[%s2] sm:$0x1]
    %v95 = vperm.slane %v93, 0
    %v106 = vunpack.c.l.b16 %v80
    %v107 = vunpack.c.l.b16 %v81
    %v108 = vunpack.c.l.b16 %v82
    %v109 = vunpack.c.l.b16 %v83
    %v110 = vunpack.c.l.b16 %v84
    %v111 = vunpack.c.l.b16 %v85
    %v112 = vunpack.c.l.b16 %v86
    %v113 = vunpack.c.l.b16 %v87
    %v114 = vunpack.c.l.b16 %v88
    %v115 = vpack.c.b16 %v107, %v106
    %v116 = vpack.c.b16 %v109, %v108
    %v117 = vpack.c.b16 %v111, %v110
    %v118 = vpack.c.b16 %v113, %v112
    %v119 = vpack.c.b16 %v114, %v114
    %v124 = vunpack.c.l.b16 %v89
    %v125 = vunpack.c.l.b16 %v90
    %v126 = vunpack.c.l.b16 %v91
    %v127 = vunpack.c.l.b16 %v92
    %v128 = vpack.c.b16 %v125, %v124
    %v129 = vpack.c.b16 %v127, %v126
    %vm132 = vcmask 261120
    %v134 = vsel %vm132, %v115, 0
    %v137 = vsel %vm132, %v116, 0
    %v140 = vsel %vm132, %v117, 0
    %v143 = vsel %vm132, %v118, 0
    %v146 = vsel %vm132, %v119, 0
    %148 = vmatpush.bf16.msra.mxu0 0
    %149 = vmatpush.bf16.msra.mxu0 0
    %150 = vmatpush.bf16.msra.mxu0 0
    %151 = vmatpush.bf16.msra.mxu0 0
    %152 = vmatpush.bf16.msra.mxu0 0
    %153 = vmatpush.bf16.msra.mxu0 0
    %154 = vmatpush.bf16.msra.mxu0 %v129
    %155 = vmatpush.bf16.msra.mxu0 %v128
    %156 = vmatmul.bf16.gmra.mxu0 %v134
    %v157 = vpop.f32.mrf.mxu0
    %v158 = vadd.f32 %v95, %v157
    %v159 = vpop.f32.mrf.mxu0
    %v160 = vadd.f32 %v95, %v159
    %161 = vmatmul.bf16.gmra.mxu0 %v137
    %v162 = vpop.f32.mrf.mxu0
    %v163 = vadd.f32 %v95, %v162
    %v164 = vpop.f32.mrf.mxu0
    %v165 = vadd.f32 %v95, %v164
    %166 = vmatmul.bf16.gmra.mxu0 %v140
    %v167 = vpop.f32.mrf.mxu0
    %v168 = vadd.f32 %v95, %v167
    %v169 = vpop.f32.mrf.mxu0
    %v170 = vadd.f32 %v95, %v169
    %171 = vmatmul.bf16.gmra.mxu0 %v143
    %v172 = vpop.f32.mrf.mxu0
    %v173 = vadd.f32 %v95, %v172
    %v174 = vpop.f32.mrf.mxu0
    %v175 = vadd.f32 %v95, %v174
    %176 = vmatmul.bf16.gmra.mxu0 %v146
    %v177 = vpop.f32.mrf.mxu0
    %v178 = vadd.f32 %v95, %v177
    %v179 = vpop.f32.mrf.mxu0
    %180 = vdwg.mxu0
    %v181 = vmax.f32 %v158, 0.0
    %v182 = vmax.f32 %v160, 0.0
    %v183 = vmax.f32 %v163, 0.0
    %v184 = vmax.f32 %v165, 0.0
    %v185 = vmax.f32 %v168, 0.0
    %v186 = vmax.f32 %v170, 0.0
    %v187 = vmax.f32 %v173, 0.0
    %v188 = vmax.f32 %v175, 0.0
    %v189 = vmax.f32 %v178, 0.0
    %v190 = vpack.c.bf16 %v181, %v181
    %v191 = vpack.c.bf16 %v182, %v182
    %v192 = vpack.c.bf16 %v183, %v183
    %v193 = vpack.c.bf16 %v184, %v184
    %v194 = vpack.c.bf16 %v185, %v185
    %v195 = vpack.c.bf16 %v186, %v186
    %v196 = vpack.c.bf16 %v187, %v187
    %v197 = vpack.c.bf16 %v188, %v188
    %v198 = vpack.c.bf16 %v189, %v189
    %v208 = vunpack.c.l.b16 %v190
    %v209 = vunpack.c.l.b16 %v191
    %v210 = vunpack.c.l.b16 %v192
    %v211 = vunpack.c.l.b16 %v193
    %v212 = vunpack.c.l.b16 %v194
    %v213 = vunpack.c.l.b16 %v195
    %v214 = vunpack.c.l.b16 %v196
    %v215 = vunpack.c.l.b16 %v197
    %v216 = vunpack.c.l.b16 %v198
    %v217 = vld [vmem:[#allocation2] sm:$0xff]
    %v218 = vld [vmem:[#allocation2 + $0x8] sm:$0xff]
    %v219 = vld [vmem:[#allocation2 + $0x10] sm:$0xff]
    %v220 = vld [vmem:[#allocation2 + $0x18] sm:$0xff]
    %v221 = vld [vmem:[#allocation2 + $0x20] sm:$0xff]
    %v222 = vld [vmem:[#allocation2 + $0x28] sm:$0xff]
    %v223 = vld [vmem:[#allocation2 + $0x30] sm:$0xff]
    %v224 = vld [vmem:[#allocation2 + $0x38] sm:$0xff]
    %v225 = vld [vmem:[#allocation2 + $0x40] sm:$0xff]
    %v226 = vld [vmem:[#allocation2 + $0x48] sm:$0xff]
    %v227 = vld [vmem:[#allocation2 + $0x50] sm:$0xff]
    %v228 = vld [vmem:[#allocation2 + $0x58] sm:$0xff]
    %v229 = vld [vmem:[#allocation2 + $0x60] sm:$0xff]
    %v230 = vld [vmem:[#allocation2 + $0x68] sm:$0xff]
    %v231 = vld [vmem:[#allocation2 + $0x70] sm:$0xff]
    %v232 = vld [vmem:[#allocation2 + $0x78] sm:$0xff]
    %v233 = vld [vmem:[#allocation2 + $0x80] sm:$0xff]
    %v234 = vld [vmem:[#allocation2 + $0x88] sm:$0xff]
    %v235 = vld [vmem:[#allocation2 + $0x90] sm:$0xff]
    %v236 = vld [vmem:[#allocation2 + $0x98] sm:$0xff]
    %v237 = vld [vmem:[#allocation2 + $0xa0] sm:$0xff]
    %v238 = vld [vmem:[#allocation2 + $0xa8] sm:$0xff]
    %v239 = vld [vmem:[#allocation2 + $0xb0] sm:$0xff]
    %v240 = vld [vmem:[#allocation2 + $0xb8] sm:$0xff]
    %v241 = vld [vmem:[#allocation2 + $0xc0] sm:$0xff]
    %v242 = vld [vmem:[#allocation2 + $0xc8] sm:$0xff]
    %v243 = vld [vmem:[#allocation2 + $0xd0] sm:$0xff]
    %v244 = vld [vmem:[#allocation2 + $0xd8] sm:$0xff]
    %v245 = vld [vmem:[#allocation2 + $0xe0] sm:$0xff]
    %v246 = vld [vmem:[#allocation2 + $0xe8] sm:$0xff]
    %v247 = vld [vmem:[#allocation2 + $0xf0] sm:$0xff]
    %v248 = vld [vmem:[#allocation2 + $0xf8] sm:$0xff]
    %v249 = vld [vmem:[#allocation2 + $0x100] sm:$0xff]
    %v250 = vld [vmem:[#allocation2 + $0x108] sm:$0xff]
    %v251 = vld [vmem:[#allocation2 + $0x110] sm:$0xff]
    %v252 = vld [vmem:[#allocation2 + $0x118] sm:$0xff]
    %v253 = vld [vmem:[#allocation2 + $0x120] sm:$0xff]
    %v254 = vld [vmem:[#allocation2 + $0x128] sm:$0xff]
    %v255 = vld [vmem:[#allocation2 + $0x130] sm:$0xff]
    %v256 = vld [vmem:[#allocation2 + $0x138] sm:$0xff]
    %v257 = vld [vmem:[#allocation2 + $0x140] sm:$0xff]
    %v258 = vld [vmem:[#allocation2 + $0x148] sm:$0xff]
    %v259 = vld [vmem:[#allocation2 + $0x150] sm:$0xff]
    %v260 = vld [vmem:[#allocation2 + $0x158] sm:$0xff]
    %v261 = vld [vmem:[#allocation2 + $0x160] sm:$0xff]
    %v262 = vld [vmem:[#allocation2 + $0x168] sm:$0xff]
    %v263 = vld [vmem:[#allocation2 + $0x170] sm:$0xff]
    %v264 = vld [vmem:[#allocation2 + $0x178] sm:$0xff]
    %v265 = vld [vmem:[#allocation2 + $0x180] sm:$0xff]
    %v266 = vld [vmem:[#allocation2 + $0x188] sm:$0xff]
    %v267 = vld [vmem:[#allocation2 + $0x190] sm:$0xff]
    %v268 = vld [vmem:[#allocation2 + $0x198] sm:$0xff]
    %v269 = vld [vmem:[#allocation2 + $0x1a0] sm:$0xff]
    %v270 = vld [vmem:[#allocation2 + $0x1a8] sm:$0xff]
    %v271 = vld [vmem:[#allocation2 + $0x1b0] sm:$0xff]
    %v272 = vld [vmem:[#allocation2 + $0x1b8] sm:$0xff]
    %v273 = vld [vmem:[#allocation2 + $0x1c0] sm:$0xff]
    %v274 = vld [vmem:[#allocation2 + $0x1c8] sm:$0xff]
    %v275 = vld [vmem:[#allocation2 + $0x1d0] sm:$0xff]
    %v276 = vld [vmem:[#allocation2 + $0x1d8] sm:$0xff]
    %v277 = vld [vmem:[#allocation2 + $0x1e0] sm:$0xff]
    %v278 = vld [vmem:[#allocation2 + $0x1e8] sm:$0xff]
    %v279 = vld [vmem:[#allocation2 + $0x1f0] sm:$0xff]
    %v280 = vld [vmem:[#allocation2 + $0x1f8] sm:$0xff]
    %v281 = vld [vmem:[#allocation2 + $0x200] sm:$0xff]
    %v282 = vld [vmem:[#allocation2 + $0x208] sm:$0xff]
    %v283 = vld [vmem:[#allocation2 + $0x210] sm:$0xff]
    %v284 = vld [vmem:[#allocation2 + $0x218] sm:$0xff]
    %v285 = vld [vmem:[#allocation2 + $0x220] sm:$0xff]
    %v286 = vld [vmem:[#allocation2 + $0x228] sm:$0xff]
    %v287 = vld [vmem:[#allocation2 + $0x230] sm:$0xff]
    %v288 = vld [vmem:[#allocation2 + $0x238] sm:$0xff]
    %v289 = vld [vmem:[#allocation2 + $0x240] sm:$0xff]
    %v290 = vld [vmem:[#allocation2 + $0x248] sm:$0xff]
    %v291 = vld [vmem:[#allocation2 + $0x250] sm:$0xff]
    %v292 = vld [vmem:[#allocation2 + $0x258] sm:$0xff]
    %v293 = vld [vmem:[#allocation2 + $0x260] sm:$0xff]
    %v294 = vld [vmem:[#allocation2 + $0x268] sm:$0xff]
    %v295 = vld [vmem:[#allocation2 + $0x270] sm:$0xff]
    %v296 = vld [vmem:[#allocation2 + $0x278] sm:$0xff]
    %v297 = vld [vmem:[%s4] sm:$0x3]
    %v299 = vperm.slane %v297, 0
    %v300 = vperm.slane %v297, 1
    %v303 = vpack.c.b16 %v209, %v208
    %v304 = vpack.c.b16 %v210, %v209
    %v305 = vpack.c.b16 %v211, %v210
    %v306 = vpack.c.b16 %v212, %v211
    %v307 = vpack.c.b16 %v213, %v212
    %v308 = vpack.c.b16 %v214, %v213
    %v309 = vpack.c.b16 %v215, %v214
    %v310 = vpack.c.b16 %v212, %v212
    %v311 = vpack.c.b16 %v213, %v213
    %v312 = vpack.c.b16 %v214, %v214
    %v313 = vpack.c.b16 %v215, %v215
    %v314 = vpack.c.b16 %v216, %v216
    %v407 = vunpack.c.l.b16 %v217
    %v408 = vunpack.c.h.b16 %v217
    %v409 = vunpack.c.l.b16 %v218
    %v410 = vunpack.c.h.b16 %v218
    %v411 = vunpack.c.l.b16 %v219
    %v412 = vunpack.c.h.b16 %v219
    %v413 = vunpack.c.l.b16 %v220
    %v414 = vunpack.c.h.b16 %v220
    %v415 = vunpack.c.l.b16 %v221
    %v416 = vunpack.c.h.b16 %v221
    %v417 = vunpack.c.l.b16 %v222
    %v418 = vunpack.c.h.b16 %v222
    %v419 = vunpack.c.l.b16 %v223
    %v420 = vunpack.c.h.b16 %v223
    %v421 = vunpack.c.l.b16 %v224
    %v422 = vunpack.c.h.b16 %v224
    %v423 = vunpack.c.l.b16 %v225
    %v424 = vunpack.c.h.b16 %v225
    %v425 = vunpack.c.l.b16 %v226
    %v426 = vunpack.c.h.b16 %v226
    %v427 = vunpack.c.l.b16 %v227
    %v428 = vunpack.c.h.b16 %v227
    %v429 = vunpack.c.l.b16 %v228
    %v430 = vunpack.c.h.b16 %v228
    %v431 = vunpack.c.l.b16 %v229
    %v432 = vunpack.c.h.b16 %v229
    %v433 = vunpack.c.l.b16 %v230
    %v434 = vunpack.c.h.b16 %v230
    %v435 = vunpack.c.l.b16 %v231
    %v436 = vunpack.c.h.b16 %v231
    %v437 = vunpack.c.l.b16 %v232
    %v438 = vunpack.c.h.b16 %v232
    %v439 = vunpack.c.l.b16 %v233
    %v440 = vunpack.c.h.b16 %v233
    %v441 = vunpack.c.l.b16 %v234
    %v442 = vunpack.c.h.b16 %v234
    %v443 = vunpack.c.l.b16 %v235
    %v444 = vunpack.c.h.b16 %v235
    %v445 = vunpack.c.l.b16 %v236
    %v446 = vunpack.c.h.b16 %v236
    %v447 = vunpack.c.l.b16 %v237
    %v448 = vunpack.c.h.b16 %v237
    %v449 = vunpack.c.l.b16 %v238
    %v450 = vunpack.c.h.b16 %v238
    %v451 = vunpack.c.l.b16 %v239
    %v452 = vunpack.c.h.b16 %v239
    %v453 = vunpack.c.l.b16 %v240
    %v454 = vunpack.c.h.b16 %v240
    %v455 = vunpack.c.l.b16 %v241
    %v456 = vunpack.c.h.b16 %v241
    %v457 = vunpack.c.l.b16 %v242
    %v458 = vunpack.c.h.b16 %v242
    %v459 = vunpack.c.l.b16 %v243
    %v460 = vunpack.c.h.b16 %v243
    %v461 = vunpack.c.l.b16 %v244
    %v462 = vunpack.c.h.b16 %v244
    %v463 = vunpack.c.l.b16 %v245
    %v464 = vunpack.c.h.b16 %v245
    %v465 = vunpack.c.l.b16 %v246
    %v466 = vunpack.c.h.b16 %v246
    %v467 = vunpack.c.l.b16 %v247
    %v468 = vunpack.c.h.b16 %v247
    %v469 = vunpack.c.l.b16 %v248
    %v470 = vunpack.c.h.b16 %v248
    %v471 = vunpack.c.l.b16 %v249
    %v472 = vunpack.c.h.b16 %v249
    %v473 = vunpack.c.l.b16 %v250
    %v474 = vunpack.c.h.b16 %v250
    %v475 = vunpack.c.l.b16 %v251
    %v476 = vunpack.c.h.b16 %v251
    %v477 = vunpack.c.l.b16 %v252
    %v478 = vunpack.c.h.b16 %v252
    %v479 = vunpack.c.l.b16 %v253
    %v480 = vunpack.c.h.b16 %v253
    %v481 = vunpack.c.l.b16 %v254
    %v482 = vunpack.c.h.b16 %v254
    %v483 = vunpack.c.l.b16 %v255
    %v484 = vunpack.c.h.b16 %v255
    %v485 = vunpack.c.l.b16 %v256
    %v486 = vunpack.c.h.b16 %v256
    %v487 = vunpack.c.l.b16 %v257
    %v488 = vunpack.c.h.b16 %v257
    %v489 = vunpack.c.l.b16 %v258
    %v490 = vunpack.c.h.b16 %v258
    %v491 = vunpack.c.l.b16 %v259
    %v492 = vunpack.c.h.b16 %v259
    %v493 = vunpack.c.l.b16 %v260
    %v494 = vunpack.c.h.b16 %v260
    %v495 = vunpack.c.l.b16 %v261
    %v496 = vunpack.c.h.b16 %v261
    %v497 = vunpack.c.l.b16 %v262
    %v498 = vunpack.c.h.b16 %v262
    %v499 = vunpack.c.l.b16 %v263
    %v500 = vunpack.c.h.b16 %v263
    %v501 = vunpack.c.l.b16 %v264
    %v502 = vunpack.c.h.b16 %v264
    %v503 = vunpack.c.l.b16 %v265
    %v504 = vunpack.c.h.b16 %v265
    %v505 = vunpack.c.l.b16 %v266
    %v506 = vunpack.c.h.b16 %v266
    %v507 = vunpack.c.l.b16 %v267
    %v508 = vunpack.c.h.b16 %v267
    %v509 = vunpack.c.l.b16 %v268
    %v510 = vunpack.c.h.b16 %v268
    %v511 = vunpack.c.l.b16 %v269
    %v512 = vunpack.c.h.b16 %v269
    %v513 = vunpack.c.l.b16 %v270
    %v514 = vunpack.c.h.b16 %v270
    %v515 = vunpack.c.l.b16 %v271
    %v516 = vunpack.c.h.b16 %v271
    %v517 = vunpack.c.l.b16 %v272
    %v518 = vunpack.c.h.b16 %v272
    %v519 = vunpack.c.l.b16 %v273
    %v520 = vunpack.c.h.b16 %v273
    %v521 = vunpack.c.l.b16 %v274
    %v522 = vunpack.c.h.b16 %v274
    %v523 = vunpack.c.l.b16 %v275
    %v524 = vunpack.c.h.b16 %v275
    %v525 = vunpack.c.l.b16 %v276
    %v526 = vunpack.c.h.b16 %v276
    %v527 = vunpack.c.l.b16 %v277
    %v528 = vunpack.c.h.b16 %v277
    %v529 = vunpack.c.l.b16 %v278
    %v530 = vunpack.c.h.b16 %v278
    %v531 = vunpack.c.l.b16 %v279
    %v532 = vunpack.c.h.b16 %v279
    %v533 = vunpack.c.l.b16 %v280
    %v534 = vunpack.c.h.b16 %v280
    %v535 = vunpack.c.l.b16 %v281
    %v536 = vunpack.c.h.b16 %v281
    %v537 = vunpack.c.l.b16 %v282
    %v538 = vunpack.c.h.b16 %v282
    %v539 = vunpack.c.l.b16 %v283
    %v540 = vunpack.c.h.b16 %v283
    %v541 = vunpack.c.l.b16 %v284
    %v542 = vunpack.c.h.b16 %v284
    %v543 = vunpack.c.l.b16 %v285
    %v544 = vunpack.c.h.b16 %v285
    %v545 = vunpack.c.l.b16 %v286
    %v546 = vunpack.c.h.b16 %v286
    %v547 = vunpack.c.l.b16 %v287
    %v548 = vunpack.c.h.b16 %v287
    %v549 = vunpack.c.l.b16 %v288
    %v550 = vunpack.c.h.b16 %v288
    %v551 = vunpack.c.l.b16 %v289
    %v552 = vunpack.c.h.b16 %v289
    %v553 = vunpack.c.l.b16 %v290
    %v554 = vunpack.c.h.b16 %v290
    %v555 = vunpack.c.l.b16 %v291
    %v556 = vunpack.c.h.b16 %v291
    %v557 = vunpack.c.l.b16 %v292
    %v558 = vunpack.c.h.b16 %v292
    %v559 = vunpack.c.l.b16 %v293
    %v560 = vunpack.c.h.b16 %v293
    %v561 = vunpack.c.l.b16 %v294
    %v562 = vunpack.c.h.b16 %v294
    %v563 = vunpack.c.l.b16 %v295
    %v564 = vunpack.c.h.b16 %v295
    %v565 = vunpack.c.l.b16 %v296
    %v566 = vunpack.c.h.b16 %v296
    %v567 = vpack.c.b16 %v409, %v407
    %v568 = vpack.c.b16 %v410, %v408
    %v569 = vpack.c.b16 %v413, %v411
    %v570 = vpack.c.b16 %v414, %v412
    %v571 = vpack.c.b16 %v417, %v415
    %v572 = vpack.c.b16 %v418, %v416
    %v573 = vpack.c.b16 %v421, %v419
    %v574 = vpack.c.b16 %v422, %v420
    %v575 = vpack.c.b16 %v425, %v423
    %v576 = vpack.c.b16 %v426, %v424
    %v577 = vpack.c.b16 %v429, %v427
    %v578 = vpack.c.b16 %v430, %v428
    %v579 = vpack.c.b16 %v433, %v431
    %v580 = vpack.c.b16 %v434, %v432
    %v581 = vpack.c.b16 %v437, %v435
    %v582 = vpack.c.b16 %v438, %v436
    %v583 = vpack.c.b16 %v441, %v439
    %v584 = vpack.c.b16 %v442, %v440
    %v585 = vpack.c.b16 %v445, %v443
    %v586 = vpack.c.b16 %v446, %v444
    %v587 = vpack.c.b16 %v449, %v447
    %v588 = vpack.c.b16 %v450, %v448
    %v589 = vpack.c.b16 %v453, %v451
    %v590 = vpack.c.b16 %v454, %v452
    %v591 = vpack.c.b16 %v457, %v455
    %v592 = vpack.c.b16 %v458, %v456
    %v593 = vpack.c.b16 %v461, %v459
    %v594 = vpack.c.b16 %v462, %v460
    %v595 = vpack.c.b16 %v465, %v463
    %v596 = vpack.c.b16 %v466, %v464
    %v597 = vpack.c.b16 %v469, %v467
    %v598 = vpack.c.b16 %v470, %v468
    %v599 = vpack.c.b16 %v473, %v471
    %v600 = vpack.c.b16 %v474, %v472
    %v601 = vpack.c.b16 %v477, %v475
    %v602 = vpack.c.b16 %v478, %v476
    %v603 = vpack.c.b16 %v481, %v479
    %v604 = vpack.c.b16 %v482, %v480
    %v605 = vpack.c.b16 %v485, %v483
    %v606 = vpack.c.b16 %v486, %v484
    %v607 = vpack.c.b16 %v489, %v487
    %v608 = vpack.c.b16 %v490, %v488
    %v609 = vpack.c.b16 %v493, %v491
    %v610 = vpack.c.b16 %v494, %v492
    %v611 = vpack.c.b16 %v497, %v495
    %v612 = vpack.c.b16 %v498, %v496
    %v613 = vpack.c.b16 %v501, %v499
    %v614 = vpack.c.b16 %v502, %v500
    %v615 = vpack.c.b16 %v505, %v503
    %v616 = vpack.c.b16 %v506, %v504
    %v617 = vpack.c.b16 %v509, %v507
    %v618 = vpack.c.b16 %v510, %v508
    %v619 = vpack.c.b16 %v513, %v511
    %v620 = vpack.c.b16 %v514, %v512
    %v621 = vpack.c.b16 %v517, %v515
    %v622 = vpack.c.b16 %v518, %v516
    %v623 = vpack.c.b16 %v521, %v519
    %v624 = vpack.c.b16 %v522, %v520
    %v625 = vpack.c.b16 %v525, %v523
    %v626 = vpack.c.b16 %v526, %v524
    %v627 = vpack.c.b16 %v529, %v527
    %v628 = vpack.c.b16 %v530, %v528
    %v629 = vpack.c.b16 %v533, %v531
    %v630 = vpack.c.b16 %v534, %v532
    %v631 = vpack.c.b16 %v537, %v535
    %v632 = vpack.c.b16 %v538, %v536
    %v633 = vpack.c.b16 %v541, %v539
    %v634 = vpack.c.b16 %v542, %v540
    %v635 = vpack.c.b16 %v545, %v543
    %v636 = vpack.c.b16 %v546, %v544
    %v637 = vpack.c.b16 %v549, %v547
    %v638 = vpack.c.b16 %v550, %v548
    %v639 = vpack.c.b16 %v553, %v551
    %v640 = vpack.c.b16 %v554, %v552
    %v641 = vpack.c.b16 %v557, %v555
    %v642 = vpack.c.b16 %v558, %v556
    %v643 = vpack.c.b16 %v561, %v559
    %v644 = vpack.c.b16 %v562, %v560
    %v645 = vpack.c.b16 %v565, %v563
    %v646 = vpack.c.b16 %v566, %v564
    %727 = vmatpush.bf16.msra.mxu0 %v581
    %728 = vmatpush.bf16.msra.mxu0 %v579
    %729 = vmatpush.bf16.msra.mxu0 %v577
    %730 = vmatpush.bf16.msra.mxu0 %v575
    %731 = vmatpush.bf16.msra.mxu0 %v573
    %732 = vmatpush.bf16.msra.mxu0 %v571
    %733 = vmatpush.bf16.msra.mxu0 %v569
    %734 = vmatpush.bf16.msra.mxu0 %v567
    %735 = vmatmul.bf16.gmra.mxu0 %v303
    %v736 = vpop.f32.mrf.mxu0
    %v737 = vadd.f32 %v299, %v736
    %v738 = vpop.f32.mrf.mxu0
    %v739 = vadd.f32 %v299, %v738
    %740 = vmatmul.bf16.gmra.mxu0 %v305
    %v741 = vpop.f32.mrf.mxu0
    %v742 = vadd.f32 %v299, %v741
    %v743 = vpop.f32.mrf.mxu0
    %v744 = vadd.f32 %v299, %v743
    %745 = vmatmul.bf16.gmra.mxu0 %v310
    %v746 = vpop.f32.mrf.mxu0
    %v747 = vadd.f32 %v299, %v746
    %v748 = vpop.f32.mrf.mxu0
    %749 = vdwg.mxu0
    %750 = vmatpush.bf16.msra.mxu0 %v597
    %751 = vmatpush.bf16.msra.mxu0 %v595
    %752 = vmatpush.bf16.msra.mxu0 %v593
    %753 = vmatpush.bf16.msra.mxu0 %v591
    %754 = vmatpush.bf16.msra.mxu0 %v589
    %755 = vmatpush.bf16.msra.mxu0 %v587
    %756 = vmatpush.bf16.msra.mxu0 %v585
    %757 = vmatpush.bf16.msra.mxu0 %v583
    %758 = vmatmul.bf16.gmra.mxu0 %v304
    %v759 = vpop.f32.mrf.mxu0
    %v760 = vadd.f32 %v737, %v759
    %v761 = vpop.f32.mrf.mxu0
    %v762 = vadd.f32 %v739, %v761
    %763 = vmatmul.bf16.gmra.mxu0 %v306
    %v764 = vpop.f32.mrf.mxu0
    %v765 = vadd.f32 %v742, %v764
    %v766 = vpop.f32.mrf.mxu0
    %v767 = vadd.f32 %v744, %v766
    %768 = vmatmul.bf16.gmra.mxu0 %v311
    %v769 = vpop.f32.mrf.mxu0
    %v770 = vadd.f32 %v747, %v769
    %v771 = vpop.f32.mrf.mxu0
    %772 = vdwg.mxu0
    %773 = vmatpush.bf16.msra.mxu0 %v613
    %774 = vmatpush.bf16.msra.mxu0 %v611
    %775 = vmatpush.bf16.msra.mxu0 %v609
    %776 = vmatpush.bf16.msra.mxu0 %v607
    %777 = vmatpush.bf16.msra.mxu0 %v605
    %778 = vmatpush.bf16.msra.mxu0 %v603
    %779 = vmatpush.bf16.msra.mxu0 %v601
    %780 = vmatpush.bf16.msra.mxu0 %v599
    %781 = vmatmul.bf16.gmra.mxu0 %v305
    %v782 = vpop.f32.mrf.mxu0
    %v783 = vadd.f32 %v760, %v782
    %v784 = vpop.f32.mrf.mxu0
    %v785 = vadd.f32 %v762, %v784
    %786 = vmatmul.bf16.gmra.mxu0 %v307
    %v787 = vpop.f32.mrf.mxu0
    %v788 = vadd.f32 %v765, %v787
    %v789 = vpop.f32.mrf.mxu0
    %v790 = vadd.f32 %v767, %v789
    %791 = vmatmul.bf16.gmra.mxu0 %v312
    %v792 = vpop.f32.mrf.mxu0
    %v793 = vadd.f32 %v770, %v792
    %v794 = vpop.f32.mrf.mxu0
    %795 = vdwg.mxu0
    %796 = vmatpush.bf16.msra.mxu0 %v629
    %797 = vmatpush.bf16.msra.mxu0 %v627
    %798 = vmatpush.bf16.msra.mxu0 %v625
    %799 = vmatpush.bf16.msra.mxu0 %v623
    %800 = vmatpush.bf16.msra.mxu0 %v621
    %801 = vmatpush.bf16.msra.mxu0 %v619
    %802 = vmatpush.bf16.msra.mxu0 %v617
    %803 = vmatpush.bf16.msra.mxu0 %v615
    %804 = vmatmul.bf16.gmra.mxu0 %v306
    %v805 = vpop.f32.mrf.mxu0
    %v806 = vadd.f32 %v783, %v805
    %v807 = vpop.f32.mrf.mxu0
    %v808 = vadd.f32 %v785, %v807
    %809 = vmatmul.bf16.gmra.mxu0 %v308
    %v810 = vpop.f32.mrf.mxu0
    %v811 = vadd.f32 %v788, %v810
    %v812 = vpop.f32.mrf.mxu0
    %v813 = vadd.f32 %v790, %v812
    %814 = vmatmul.bf16.gmra.mxu0 %v313
    %v815 = vpop.f32.mrf.mxu0
    %v816 = vadd.f32 %v793, %v815
    %v817 = vpop.f32.mrf.mxu0
    %818 = vdwg.mxu0
    %819 = vmatpush.bf16.msra.mxu0 %v645
    %820 = vmatpush.bf16.msra.mxu0 %v643
    %821 = vmatpush.bf16.msra.mxu0 %v641
    %822 = vmatpush.bf16.msra.mxu0 %v639
    %823 = vmatpush.bf16.msra.mxu0 %v637
    %824 = vmatpush.bf16.msra.mxu0 %v635
    %825 = vmatpush.bf16.msra.mxu0 %v633
    %826 = vmatpush.bf16.msra.mxu0 %v631
    %827 = vmatmul.bf16.gmra.mxu0 %v307
    %v828 = vpop.f32.mrf.mxu0
    %v829 = vadd.f32 %v806, %v828
    %v830 = vpop.f32.mrf.mxu0
    %v831 = vadd.f32 %v808, %v830
    %832 = vmatmul.bf16.gmra.mxu0 %v309
    %v833 = vpop.f32.mrf.mxu0
    %v834 = vadd.f32 %v811, %v833
    %v835 = vpop.f32.mrf.mxu0
    %v836 = vadd.f32 %v813, %v835
    %837 = vmatmul.bf16.gmra.mxu0 %v314
    %v838 = vpop.f32.mrf.mxu0
    %v839 = vadd.f32 %v816, %v838
    %v840 = vpop.f32.mrf.mxu0
    %841 = vdwg.mxu0
    %842 = vmatpush.bf16.msra.mxu0 %v582
    %843 = vmatpush.bf16.msra.mxu0 %v580
    %844 = vmatpush.bf16.msra.mxu0 %v578
    %845 = vmatpush.bf16.msra.mxu0 %v576
    %846 = vmatpush.bf16.msra.mxu0 %v574
    %847 = vmatpush.bf16.msra.mxu0 %v572
    %848 = vmatpush.bf16.msra.mxu0 %v570
    %849 = vmatpush.bf16.msra.mxu0 %v568
    %850 = vmatmul.bf16.gmra.mxu0 %v303
    %v851 = vpop.f32.mrf.mxu0
    %v852 = vadd.f32 %v300, %v851
    %v853 = vpop.f32.mrf.mxu0
    %v854 = vadd.f32 %v300, %v853
    %855 = vmatmul.bf16.gmra.mxu0 %v305
    %v856 = vpop.f32.mrf.mxu0
    %v857 = vadd.f32 %v300, %v856
    %v858 = vpop.f32.mrf.mxu0
    %v859 = vadd.f32 %v300, %v858
    %860 = vmatmul.bf16.gmra.mxu0 %v310
    %v861 = vpop.f32.mrf.mxu0
    %v862 = vadd.f32 %v300, %v861
    %v863 = vpop.f32.mrf.mxu0
    %864 = vdwg.mxu0
    %865 = vmatpush.bf16.msra.mxu0 %v598
    %866 = vmatpush.bf16.msra.mxu0 %v596
    %867 = vmatpush.bf16.msra.mxu0 %v594
    %868 = vmatpush.bf16.msra.mxu0 %v592
    %869 = vmatpush.bf16.msra.mxu0 %v590
    %870 = vmatpush.bf16.msra.mxu0 %v588
    %871 = vmatpush.bf16.msra.mxu0 %v586
    %872 = vmatpush.bf16.msra.mxu0 %v584
    %873 = vmatmul.bf16.gmra.mxu0 %v304
    %v874 = vpop.f32.mrf.mxu0
    %v875 = vadd.f32 %v852, %v874
    %v876 = vpop.f32.mrf.mxu0
    %v877 = vadd.f32 %v854, %v876
    %878 = vmatmul.bf16.gmra.mxu0 %v306
    %v879 = vpop.f32.mrf.mxu0
    %v880 = vadd.f32 %v857, %v879
    %v881 = vpop.f32.mrf.mxu0
    %v882 = vadd.f32 %v859, %v881
    %883 = vmatmul.bf16.gmra.mxu0 %v311
    %v884 = vpop.f32.mrf.mxu0
    %v885 = vadd.f32 %v862, %v884
    %v886 = vpop.f32.mrf.mxu0
    %887 = vdwg.mxu0
    %888 = vmatpush.bf16.msra.mxu0 %v614
    %889 = vmatpush.bf16.msra.mxu0 %v612
    %890 = vmatpush.bf16.msra.mxu0 %v610
    %891 = vmatpush.bf16.msra.mxu0 %v608
    %892 = vmatpush.bf16.msra.mxu0 %v606
    %893 = vmatpush.bf16.msra.mxu0 %v604
    %894 = vmatpush.bf16.msra.mxu0 %v602
    %895 = vmatpush.bf16.msra.mxu0 %v600
    %896 = vmatmul.bf16.gmra.mxu0 %v305
    %v897 = vpop.f32.mrf.mxu0
    %v898 = vadd.f32 %v875, %v897
    %v899 = vpop.f32.mrf.mxu0
    %v900 = vadd.f32 %v877, %v899
    %901 = vmatmul.bf16.gmra.mxu0 %v307
    %v902 = vpop.f32.mrf.mxu0
    %v903 = vadd.f32 %v880, %v902
    %v904 = vpop.f32.mrf.mxu0
    %v905 = vadd.f32 %v882, %v904
    %906 = vmatmul.bf16.gmra.mxu0 %v312
    %v907 = vpop.f32.mrf.mxu0
    %v908 = vadd.f32 %v885, %v907
    %v909 = vpop.f32.mrf.mxu0
    %910 = vdwg.mxu0
    %911 = vmatpush.bf16.msra.mxu0 %v630
    %912 = vmatpush.bf16.msra.mxu0 %v628
    %913 = vmatpush.bf16.msra.mxu0 %v626
    %914 = vmatpush.bf16.msra.mxu0 %v624
    %915 = vmatpush.bf16.msra.mxu0 %v622
    %916 = vmatpush.bf16.msra.mxu0 %v620
    %917 = vmatpush.bf16.msra.mxu0 %v618
    %918 = vmatpush.bf16.msra.mxu0 %v616
    %919 = vmatmul.bf16.gmra.mxu0 %v306
    %v920 = vpop.f32.mrf.mxu0
    %v921 = vadd.f32 %v898, %v920
    %v922 = vpop.f32.mrf.mxu0
    %v923 = vadd.f32 %v900, %v922
    %924 = vmatmul.bf16.gmra.mxu0 %v308
    %v925 = vpop.f32.mrf.mxu0
    %v926 = vadd.f32 %v903, %v925
    %v927 = vpop.f32.mrf.mxu0
    %v928 = vadd.f32 %v905, %v927
    %929 = vmatmul.bf16.gmra.mxu0 %v313
    %v930 = vpop.f32.mrf.mxu0
    %v931 = vadd.f32 %v908, %v930
    %v932 = vpop.f32.mrf.mxu0
    %933 = vdwg.mxu0
    %934 = vmatpush.bf16.msra.mxu0 %v646
    %935 = vmatpush.bf16.msra.mxu0 %v644
    %936 = vmatpush.bf16.msra.mxu0 %v642
    %937 = vmatpush.bf16.msra.mxu0 %v640
    %938 = vmatpush.bf16.msra.mxu0 %v638
    %939 = vmatpush.bf16.msra.mxu0 %v636
    %940 = vmatpush.bf16.msra.mxu0 %v634
    %941 = vmatpush.bf16.msra.mxu0 %v632
    %942 = vmatmul.bf16.gmra.mxu0 %v307
    %v943 = vpop.f32.mrf.mxu0
    %v944 = vadd.f32 %v921, %v943
    %v945 = vpop.f32.mrf.mxu0
    %v946 = vadd.f32 %v923, %v945
    %947 = vmatmul.bf16.gmra.mxu0 %v309
    %v948 = vpop.f32.mrf.mxu0
    %v949 = vadd.f32 %v926, %v948
    %v950 = vpop.f32.mrf.mxu0
    %v951 = vadd.f32 %v928, %v950
    %952 = vmatmul.bf16.gmra.mxu0 %v314
    %v953 = vpop.f32.mrf.mxu0
    %v954 = vadd.f32 %v931, %v953
    %v955 = vpop.f32.mrf.mxu0
    %956 = vdwg.mxu0
    %v957 = vmax.f32 %v829, 0.0
    %v958 = vmax.f32 %v944, 0.0
    %v959 = vmax.f32 %v831, 0.0
    %v960 = vmax.f32 %v946, 0.0
    %v961 = vmax.f32 %v834, 0.0
    %v962 = vmax.f32 %v949, 0.0
    %v963 = vmax.f32 %v836, 0.0
    %v964 = vmax.f32 %v951, 0.0
    %v965 = vmax.f32 %v839, 0.0
    %v966 = vmax.f32 %v954, 0.0
    %v967 = vpack.c.bf16 %v958, %v957
    %v968 = vpack.c.bf16 %v960, %v959
    %v969 = vpack.c.bf16 %v962, %v961
    %v970 = vpack.c.bf16 %v964, %v963
    %v971 = vpack.c.bf16 %v966, %v965
    %v975 = vunpack.c.l.b16 %v967
    %v976 = vunpack.c.h.b16 %v967
    %v977 = vunpack.c.l.b16 %v968
    %v978 = vunpack.c.h.b16 %v968
    %v979 = vunpack.c.l.b16 %v969
    %v980 = vunpack.c.h.b16 %v969
    %v982 = vunpack.c.l.b16 %v970
    %v983 = vunpack.c.h.b16 %v970
    %v985 = vunpack.c.l.b16 %v971
    %v986 = vunpack.c.h.b16 %v971
    %v987 = vld [vmem:[#allocation4] sm:$0xf]
    %v988 = vld [vmem:[#allocation4 + $0x4] sm:$0xf]
    %v989 = vld [vmem:[#allocation4 + $0x8] sm:$0xf]
    %v990 = vld [vmem:[#allocation4 + $0xc] sm:$0xf]
    %v991 = vld [vmem:[#allocation4 + $0x10] sm:$0xf]
    %v992 = vld [vmem:[#allocation4 + $0x14] sm:$0xf]
    %v993 = vld [vmem:[#allocation4 + $0x18] sm:$0xf]
    %v994 = vld [vmem:[#allocation4 + $0x1c] sm:$0xf]
    %v995 = vld [vmem:[#allocation4 + $0x20] sm:$0xf]
    %v996 = vld [vmem:[#allocation4 + $0x24] sm:$0xf]
    %v997 = vld [vmem:[#allocation4 + $0x28] sm:$0xf]
    %v998 = vld [vmem:[#allocation4 + $0x2c] sm:$0xf]
    %v999 = vld [vmem:[#allocation4 + $0x30] sm:$0xf]
    %v1000 = vld [vmem:[#allocation4 + $0x34] sm:$0xf]
    %v1001 = vld [vmem:[#allocation4 + $0x38] sm:$0xf]
    %v1002 = vld [vmem:[#allocation4 + $0x3c] sm:$0xf]
    %v1003 = vld [vmem:[#allocation4 + $0x40] sm:$0xf]
    %v1004 = vld [vmem:[#allocation4 + $0x44] sm:$0xf]
    %v1005 = vld [vmem:[#allocation4 + $0x48] sm:$0xf]
    %v1006 = vld [vmem:[#allocation4 + $0x4c] sm:$0xf]
    %v1007 = vld [vmem:[#allocation4 + $0x50] sm:$0xf]
    %v1008 = vld [vmem:[#allocation4 + $0x54] sm:$0xf]
    %v1009 = vld [vmem:[#allocation4 + $0x58] sm:$0xf]
    %v1010 = vld [vmem:[#allocation4 + $0x5c] sm:$0xf]
    %v1011 = vld [vmem:[#allocation4 + $0x60] sm:$0xf]
    %v1012 = vld [vmem:[#allocation4 + $0x64] sm:$0xf]
    %v1013 = vld [vmem:[#allocation4 + $0x68] sm:$0xf]
    %v1014 = vld [vmem:[#allocation4 + $0x6c] sm:$0xf]
    %v1015 = vld [vmem:[#allocation4 + $0x70] sm:$0xf]
    %v1016 = vld [vmem:[#allocation4 + $0x74] sm:$0xf]
    %v1017 = vld [vmem:[#allocation4 + $0x78] sm:$0xf]
    %v1018 = vld [vmem:[#allocation4 + $0x7c] sm:$0xf]
    %v1019 = vld [vmem:[#allocation4 + $0x80] sm:$0xf]
    %v1020 = vld [vmem:[#allocation4 + $0x84] sm:$0xf]
    %v1021 = vld [vmem:[#allocation4 + $0x88] sm:$0xf]
    %v1022 = vld [vmem:[#allocation4 + $0x8c] sm:$0xf]
    %v1023 = vld [vmem:[#allocation4 + $0x90] sm:$0xf]
    %v1024 = vld [vmem:[#allocation4 + $0x94] sm:$0xf]
    %v1025 = vld [vmem:[#allocation4 + $0x98] sm:$0xf]
    %v1026 = vld [vmem:[#allocation4 + $0x9c] sm:$0xf]
    %v1027 = vld [vmem:[#allocation4 + $0xa0] sm:$0xf]
    %v1028 = vld [vmem:[#allocation4 + $0xa4] sm:$0xf]
    %v1029 = vld [vmem:[#allocation4 + $0xa8] sm:$0xf]
    %v1030 = vld [vmem:[#allocation4 + $0xac] sm:$0xf]
    %v1031 = vld [vmem:[#allocation4 + $0xb0] sm:$0xf]
    %v1032 = vld [vmem:[#allocation4 + $0xb4] sm:$0xf]
    %v1033 = vld [vmem:[#allocation4 + $0xb8] sm:$0xf]
    %v1034 = vld [vmem:[#allocation4 + $0xbc] sm:$0xf]
    %v1035 = vld [vmem:[#allocation4 + $0xc0] sm:$0xf]
    %v1036 = vld [vmem:[#allocation4 + $0xc4] sm:$0xf]
    %v1037 = vld [vmem:[#allocation4 + $0xc8] sm:$0xf]
    %v1038 = vld [vmem:[#allocation4 + $0xcc] sm:$0xf]
    %v1039 = vld [vmem:[#allocation4 + $0xd0] sm:$0xf]
    %v1040 = vld [vmem:[#allocation4 + $0xd4] sm:$0xf]
    %v1041 = vld [vmem:[#allocation4 + $0xd8] sm:$0xf]
    %v1042 = vld [vmem:[#allocation4 + $0xdc] sm:$0xf]
    %v1043 = vld [vmem:[#allocation4 + $0xe0] sm:$0xf]
    %v1044 = vld [vmem:[#allocation4 + $0xe4] sm:$0xf]
    %v1045 = vld [vmem:[#allocation4 + $0xe8] sm:$0xf]
    %v1046 = vld [vmem:[#allocation4 + $0xec] sm:$0xf]
    %v1047 = vld [vmem:[#allocation4 + $0xf0] sm:$0xf]
    %v1048 = vld [vmem:[#allocation4 + $0xf4] sm:$0xf]
    %v1049 = vld [vmem:[#allocation4 + $0xf8] sm:$0xf]
    %v1050 = vld [vmem:[#allocation4 + $0xfc] sm:$0xf]
    %v1051 = vld [vmem:[#allocation4 + $0x100] sm:$0xf]
    %v1052 = vld [vmem:[#allocation4 + $0x104] sm:$0xf]
    %v1053 = vld [vmem:[#allocation4 + $0x108] sm:$0xf]
    %v1054 = vld [vmem:[#allocation4 + $0x10c] sm:$0xf]
    %v1055 = vld [vmem:[#allocation4 + $0x110] sm:$0xf]
    %v1056 = vld [vmem:[#allocation4 + $0x114] sm:$0xf]
    %v1057 = vld [vmem:[#allocation4 + $0x118] sm:$0xf]
    %v1058 = vld [vmem:[#allocation4 + $0x11c] sm:$0xf]
    %v1059 = vld [vmem:[#allocation4 + $0x120] sm:$0xf]
    %v1060 = vld [vmem:[#allocation4 + $0x124] sm:$0xf]
    %v1061 = vld [vmem:[#allocation4 + $0x128] sm:$0xf]
    %v1062 = vld [vmem:[#allocation4 + $0x12c] sm:$0xf]
    %v1063 = vld [vmem:[#allocation4 + $0x130] sm:$0xf]
    %v1064 = vld [vmem:[#allocation4 + $0x134] sm:$0xf]
    %v1065 = vld [vmem:[#allocation4 + $0x138] sm:$0xf]
    %v1066 = vld [vmem:[#allocation4 + $0x13c] sm:$0xf]
    %v1067 = vld [vmem:[#allocation4 + $0x140] sm:$0xf]
    %v1068 = vld [vmem:[#allocation4 + $0x144] sm:$0xf]
    %v1069 = vld [vmem:[#allocation4 + $0x148] sm:$0xf]
    %v1070 = vld [vmem:[#allocation4 + $0x14c] sm:$0xf]
    %v1071 = vld [vmem:[#allocation4 + $0x150] sm:$0xf]
    %v1072 = vld [vmem:[#allocation4 + $0x154] sm:$0xf]
    %v1073 = vld [vmem:[#allocation4 + $0x158] sm:$0xf]
    %v1074 = vld [vmem:[#allocation4 + $0x15c] sm:$0xf]
    %v1075 = vld [vmem:[#allocation4 + $0x160] sm:$0xf]
    %v1076 = vld [vmem:[#allocation4 + $0x164] sm:$0xf]
    %v1077 = vld [vmem:[#allocation4 + $0x168] sm:$0xf]
    %v1078 = vld [vmem:[#allocation4 + $0x16c] sm:$0xf]
    %v1079 = vld [vmem:[#allocation4 + $0x170] sm:$0xf]
    %v1080 = vld [vmem:[#allocation4 + $0x174] sm:$0xf]
    %v1081 = vld [vmem:[#allocation4 + $0x178] sm:$0xf]
    %v1082 = vld [vmem:[#allocation4 + $0x17c] sm:$0xf]
    %v1083 = vld [vmem:[%s6] sm:$0x1]
    %v1085 = vperm.slane %v1083, 0
    %v1087 = vpack.c.b16 %v977, %v975
    %v1088 = vpack.c.b16 %v978, %v976
    %v1089 = vpack.c.b16 %v979, %v977
    %v1090 = vpack.c.b16 %v980, %v978
    %v1091 = vpack.c.b16 %v982, %v979
    %v1092 = vpack.c.b16 %v983, %v980
    %v1093 = vpack.c.b16 %v979, %v979
    %v1094 = vpack.c.b16 %v980, %v980
    %v1095 = vpack.c.b16 %v982, %v982
    %v1096 = vpack.c.b16 %v983, %v983
    %v1097 = vpack.c.b16 %v985, %v985
    %v1098 = vpack.c.b16 %v986, %v986
    %v1207 = vunpack.c.l.b16 %v987
    %v1208 = vunpack.c.l.b16 %v988
    %v1209 = vunpack.c.l.b16 %v989
    %v1210 = vunpack.c.l.b16 %v990
    %v1211 = vunpack.c.l.b16 %v991
    %v1212 = vunpack.c.l.b16 %v992
    %v1213 = vunpack.c.l.b16 %v993
    %v1214 = vunpack.c.l.b16 %v994
    %v1215 = vunpack.c.l.b16 %v995
    %v1216 = vunpack.c.l.b16 %v996
    %v1217 = vunpack.c.l.b16 %v997
    %v1218 = vunpack.c.l.b16 %v998
    %v1219 = vunpack.c.l.b16 %v999
    %v1220 = vunpack.c.l.b16 %v1000
    %v1221 = vunpack.c.l.b16 %v1001
    %v1222 = vunpack.c.l.b16 %v1002
    %v1223 = vunpack.c.l.b16 %v1003
    %v1224 = vunpack.c.l.b16 %v1004
    %v1225 = vunpack.c.l.b16 %v1005
    %v1226 = vunpack.c.l.b16 %v1006
    %v1227 = vunpack.c.l.b16 %v1007
    %v1228 = vunpack.c.l.b16 %v1008
    %v1229 = vunpack.c.l.b16 %v1009
    %v1230 = vunpack.c.l.b16 %v1010
    %v1231 = vunpack.c.l.b16 %v1011
    %v1232 = vunpack.c.l.b16 %v1012
    %v1233 = vunpack.c.l.b16 %v1013
    %v1234 = vunpack.c.l.b16 %v1014
    %v1235 = vunpack.c.l.b16 %v1015
    %v1236 = vunpack.c.l.b16 %v1016
    %v1237 = vunpack.c.l.b16 %v1017
    %v1238 = vunpack.c.l.b16 %v1018
    %v1239 = vunpack.c.l.b16 %v1019
    %v1240 = vunpack.c.l.b16 %v1020
    %v1241 = vunpack.c.l.b16 %v1021
    %v1242 = vunpack.c.l.b16 %v1022
    %v1243 = vunpack.c.l.b16 %v1023
    %v1244 = vunpack.c.l.b16 %v1024
    %v1245 = vunpack.c.l.b16 %v1025
    %v1246 = vunpack.c.l.b16 %v1026
    %v1247 = vunpack.c.l.b16 %v1027
    %v1248 = vunpack.c.l.b16 %v1028
    %v1249 = vunpack.c.l.b16 %v1029
    %v1250 = vunpack.c.l.b16 %v1030
    %v1251 = vunpack.c.l.b16 %v1031
    %v1252 = vunpack.c.l.b16 %v1032
    %v1253 = vunpack.c.l.b16 %v1033
    %v1254 = vunpack.c.l.b16 %v1034
    %v1255 = vunpack.c.l.b16 %v1035
    %v1256 = vunpack.c.l.b16 %v1036
    %v1257 = vunpack.c.l.b16 %v1037
    %v1258 = vunpack.c.l.b16 %v1038
    %v1259 = vunpack.c.l.b16 %v1039
    %v1260 = vunpack.c.l.b16 %v1040
    %v1261 = vunpack.c.l.b16 %v1041
    %v1262 = vunpack.c.l.b16 %v1042
    %v1263 = vunpack.c.l.b16 %v1043
    %v1264 = vunpack.c.l.b16 %v1044
    %v1265 = vunpack.c.l.b16 %v1045
    %v1266 = vunpack.c.l.b16 %v1046
    %v1267 = vunpack.c.l.b16 %v1047
    %v1268 = vunpack.c.l.b16 %v1048
    %v1269 = vunpack.c.l.b16 %v1049
    %v1270 = vunpack.c.l.b16 %v1050
    %v1271 = vunpack.c.l.b16 %v1051
    %v1272 = vunpack.c.l.b16 %v1052
    %v1273 = vunpack.c.l.b16 %v1053
    %v1274 = vunpack.c.l.b16 %v1054
    %v1275 = vunpack.c.l.b16 %v1055
    %v1276 = vunpack.c.l.b16 %v1056
    %v1277 = vunpack.c.l.b16 %v1057
    %v1278 = vunpack.c.l.b16 %v1058
    %v1279 = vunpack.c.l.b16 %v1059
    %v1280 = vunpack.c.l.b16 %v1060
    %v1281 = vunpack.c.l.b16 %v1061
    %v1282 = vunpack.c.l.b16 %v1062
    %v1283 = vunpack.c.l.b16 %v1063
    %v1284 = vunpack.c.l.b16 %v1064
    %v1285 = vunpack.c.l.b16 %v1065
    %v1286 = vunpack.c.l.b16 %v1066
    %v1287 = vunpack.c.l.b16 %v1067
    %v1288 = vunpack.c.l.b16 %v1068
    %v1289 = vunpack.c.l.b16 %v1069
    %v1290 = vunpack.c.l.b16 %v1070
    %v1291 = vunpack.c.l.b16 %v1071
    %v1292 = vunpack.c.l.b16 %v1072
    %v1293 = vunpack.c.l.b16 %v1073
    %v1294 = vunpack.c.l.b16 %v1074
    %v1295 = vunpack.c.l.b16 %v1075
    %v1296 = vunpack.c.l.b16 %v1076
    %v1297 = vunpack.c.l.b16 %v1077
    %v1298 = vunpack.c.l.b16 %v1078
    %v1299 = vunpack.c.l.b16 %v1079
    %v1300 = vunpack.c.l.b16 %v1080
    %v1301 = vunpack.c.l.b16 %v1081
    %v1302 = vunpack.c.l.b16 %v1082
    %v1303 = vpack.c.b16 %v1208, %v1207
    %v1304 = vpack.c.b16 %v1210, %v1209
    %v1305 = vpack.c.b16 %v1212, %v1211
    %v1306 = vpack.c.b16 %v1214, %v1213
    %v1307 = vpack.c.b16 %v1216, %v1215
    %v1308 = vpack.c.b16 %v1218, %v1217
    %v1309 = vpack.c.b16 %v1220, %v1219
    %v1310 = vpack.c.b16 %v1222, %v1221
    %v1311 = vpack.c.b16 %v1224, %v1223
    %v1312 = vpack.c.b16 %v1226, %v1225
    %v1313 = vpack.c.b16 %v1228, %v1227
    %v1314 = vpack.c.b16 %v1230, %v1229
    %v1315 = vpack.c.b16 %v1232, %v1231
    %v1316 = vpack.c.b16 %v1234, %v1233
    %v1317 = vpack.c.b16 %v1236, %v1235
    %v1318 = vpack.c.b16 %v1238, %v1237
    %v1319 = vpack.c.b16 %v1240, %v1239
    %v1320 = vpack.c.b16 %v1242, %v1241
    %v1321 = vpack.c.b16 %v1244, %v1243
    %v1322 = vpack.c.b16 %v1246, %v1245
    %v1323 = vpack.c.b16 %v1248, %v1247
    %v1324 = vpack.c.b16 %v1250, %v1249
    %v1325 = vpack.c.b16 %v1252, %v1251
    %v1326 = vpack.c.b16 %v1254, %v1253
    %v1327 = vpack.c.b16 %v1256, %v1255
    %v1328 = vpack.c.b16 %v1258, %v1257
    %v1329 = vpack.c.b16 %v1260, %v1259
    %v1330 = vpack.c.b16 %v1262, %v1261
    %v1331 = vpack.c.b16 %v1264, %v1263
    %v1332 = vpack.c.b16 %v1266, %v1265
    %v1333 = vpack.c.b16 %v1268, %v1267
    %v1334 = vpack.c.b16 %v1270, %v1269
    %v1335 = vpack.c.b16 %v1272, %v1271
    %v1336 = vpack.c.b16 %v1274, %v1273
    %v1337 = vpack.c.b16 %v1276, %v1275
    %v1338 = vpack.c.b16 %v1278, %v1277
    %v1339 = vpack.c.b16 %v1280, %v1279
    %v1340 = vpack.c.b16 %v1282, %v1281
    %v1341 = vpack.c.b16 %v1284, %v1283
    %v1342 = vpack.c.b16 %v1286, %v1285
    %v1343 = vpack.c.b16 %v1288, %v1287
    %v1344 = vpack.c.b16 %v1290, %v1289
    %v1345 = vpack.c.b16 %v1292, %v1291
    %v1346 = vpack.c.b16 %v1294, %v1293
    %v1347 = vpack.c.b16 %v1296, %v1295
    %v1348 = vpack.c.b16 %v1298, %v1297
    %v1349 = vpack.c.b16 %v1300, %v1299
    %v1350 = vpack.c.b16 %v1302, %v1301
    %1399 = vmatpush.bf16.msra.mxu0 %v1310
    %1400 = vmatpush.bf16.msra.mxu0 %v1309
    %1401 = vmatpush.bf16.msra.mxu0 %v1308
    %1402 = vmatpush.bf16.msra.mxu0 %v1307
    %1403 = vmatpush.bf16.msra.mxu0 %v1306
    %1404 = vmatpush.bf16.msra.mxu0 %v1305
    %1405 = vmatpush.bf16.msra.mxu0 %v1304
    %1406 = vmatpush.bf16.msra.mxu0 %v1303
    %1407 = vmatmul.bf16.gmra.mxu0 %v1087
    %v1408 = vpop.f32.mrf.mxu0
    %v1409 = vadd.f32 %v1085, %v1408
    %v1410 = vpop.f32.mrf.mxu0
    %v1411 = vadd.f32 %v1085, %v1410
    %1412 = vmatmul.bf16.gmra.mxu0 %v1093
    %v1413 = vpop.f32.mrf.mxu0
    %v1414 = vadd.f32 %v1085, %v1413
    %v1415 = vpop.f32.mrf.mxu0
    %1416 = vdwg.mxu0
    %1417 = vmatpush.bf16.msra.mxu0 %v1318
    %1418 = vmatpush.bf16.msra.mxu0 %v1317
    %1419 = vmatpush.bf16.msra.mxu0 %v1316
    %1420 = vmatpush.bf16.msra.mxu0 %v1315
    %1421 = vmatpush.bf16.msra.mxu0 %v1314
    %1422 = vmatpush.bf16.msra.mxu0 %v1313
    %1423 = vmatpush.bf16.msra.mxu0 %v1312
    %1424 = vmatpush.bf16.msra.mxu0 %v1311
    %1425 = vmatmul.bf16.gmra.mxu0 %v1088
    %v1426 = vpop.f32.mrf.mxu0
    %v1427 = vadd.f32 %v1409, %v1426
    %v1428 = vpop.f32.mrf.mxu0
    %v1429 = vadd.f32 %v1411, %v1428
    %1430 = vmatmul.bf16.gmra.mxu0 %v1094
    %v1431 = vpop.f32.mrf.mxu0
    %v1432 = vadd.f32 %v1414, %v1431
    %v1433 = vpop.f32.mrf.mxu0
    %1434 = vdwg.mxu0
    %1435 = vmatpush.bf16.msra.mxu0 %v1326
    %1436 = vmatpush.bf16.msra.mxu0 %v1325
    %1437 = vmatpush.bf16.msra.mxu0 %v1324
    %1438 = vmatpush.bf16.msra.mxu0 %v1323
    %1439 = vmatpush.bf16.msra.mxu0 %v1322
    %1440 = vmatpush.bf16.msra.mxu0 %v1321
    %1441 = vmatpush.bf16.msra.mxu0 %v1320
    %1442 = vmatpush.bf16.msra.mxu0 %v1319
    %1443 = vmatmul.bf16.gmra.mxu0 %v1089
    %v1444 = vpop.f32.mrf.mxu0
    %v1445 = vadd.f32 %v1427, %v1444
    %v1446 = vpop.f32.mrf.mxu0
    %v1447 = vadd.f32 %v1429, %v1446
    %1448 = vmatmul.bf16.gmra.mxu0 %v1095
    %v1449 = vpop.f32.mrf.mxu0
    %v1450 = vadd.f32 %v1432, %v1449
    %v1451 = vpop.f32.mrf.mxu0
    %1452 = vdwg.mxu0
    %1453 = vmatpush.bf16.msra.mxu0 %v1334
    %1454 = vmatpush.bf16.msra.mxu0 %v1333
    %1455 = vmatpush.bf16.msra.mxu0 %v1332
    %1456 = vmatpush.bf16.msra.mxu0 %v1331
    %1457 = vmatpush.bf16.msra.mxu0 %v1330
    %1458 = vmatpush.bf16.msra.mxu0 %v1329
    %1459 = vmatpush.bf16.msra.mxu0 %v1328
    %1460 = vmatpush.bf16.msra.mxu0 %v1327
    %1461 = vmatmul.bf16.gmra.mxu0 %v1090
    %v1462 = vpop.f32.mrf.mxu0
    %v1463 = vadd.f32 %v1445, %v1462
    %v1464 = vpop.f32.mrf.mxu0
    %v1465 = vadd.f32 %v1447, %v1464
    %1466 = vmatmul.bf16.gmra.mxu0 %v1096
    %v1467 = vpop.f32.mrf.mxu0
    %v1468 = vadd.f32 %v1450, %v1467
    %v1469 = vpop.f32.mrf.mxu0
    %1470 = vdwg.mxu0
    %1471 = vmatpush.bf16.msra.mxu0 %v1342
    %1472 = vmatpush.bf16.msra.mxu0 %v1341
    %1473 = vmatpush.bf16.msra.mxu0 %v1340
    %1474 = vmatpush.bf16.msra.mxu0 %v1339
    %1475 = vmatpush.bf16.msra.mxu0 %v1338
    %1476 = vmatpush.bf16.msra.mxu0 %v1337
    %1477 = vmatpush.bf16.msra.mxu0 %v1336
    %1478 = vmatpush.bf16.msra.mxu0 %v1335
    %1479 = vmatmul.bf16.gmra.mxu0 %v1091
    %v1480 = vpop.f32.mrf.mxu0
    %v1481 = vadd.f32 %v1463, %v1480
    %v1482 = vpop.f32.mrf.mxu0
    %v1483 = vadd.f32 %v1465, %v1482
    %1484 = vmatmul.bf16.gmra.mxu0 %v1097
    %v1485 = vpop.f32.mrf.mxu0
    %v1486 = vadd.f32 %v1468, %v1485
    %v1487 = vpop.f32.mrf.mxu0
    %1488 = vdwg.mxu0
    %1489 = vmatpush.bf16.msra.mxu0 %v1350
    %1490 = vmatpush.bf16.msra.mxu0 %v1349
    %1491 = vmatpush.bf16.msra.mxu0 %v1348
    %1492 = vmatpush.bf16.msra.mxu0 %v1347
    %1493 = vmatpush.bf16.msra.mxu0 %v1346
    %1494 = vmatpush.bf16.msra.mxu0 %v1345
    %1495 = vmatpush.bf16.msra.mxu0 %v1344
    %1496 = vmatpush.bf16.msra.mxu0 %v1343
    %1497 = vmatmul.bf16.gmra.mxu0 %v1092
    %v1498 = vpop.f32.mrf.mxu0
    %v1499 = vadd.f32 %v1481, %v1498
    %v1500 = vpop.f32.mrf.mxu0
    %v1501 = vadd.f32 %v1483, %v1500
    %1502 = vmatmul.bf16.gmra.mxu0 %v1098
    %v1503 = vpop.f32.mrf.mxu0
    %v1504 = vadd.f32 %v1486, %v1503
    %v1505 = vpop.f32.mrf.mxu0
    %1506 = vdwg.mxu0
    %v1507 = vmax.f32 %v1499, 0.0
    %v1508 = vmax.f32 %v1501, 0.0
    %v1509 = vmax.f32 %v1504, 0.0
    %v1510 = vpack.c.bf16 %v1507, %v1507
    %v1511 = vpack.c.bf16 %v1508, %v1508
    %v1512 = vpack.c.bf16 %v1509, %v1509
    %v1513 = vld [vmem:[#allocation6] sm:$0xf]
    %v1514 = vld [vmem:[#allocation6 + $0x4] sm:$0xf]
    %v1515 = vld [vmem:[#allocation6 + $0x8] sm:$0xf]
    %v1516 = vld [vmem:[#allocation6 + $0xc] sm:$0xf]
    %v1517 = vld [vmem:[#allocation6 + $0x10] sm:$0xf]
    %v1518 = vld [vmem:[#allocation6 + $0x14] sm:$0xf]
    %v1519 = vld [vmem:[#allocation6 + $0x18] sm:$0xf]
    %v1520 = vld [vmem:[#allocation6 + $0x1c] sm:$0xf]
    %v1521 = vld [vmem:[#allocation6 + $0x20] sm:$0xf]
    %v1522 = vld [vmem:[#allocation6 + $0x24] sm:$0xf]
    %v1523 = vld [vmem:[#allocation6 + $0x28] sm:$0xf]
    %v1524 = vld [vmem:[#allocation6 + $0x2c] sm:$0xf]
    %v1525 = vld [vmem:[#allocation6 + $0x30] sm:$0xf]
    %v1526 = vld [vmem:[#allocation6 + $0x34] sm:$0xf]
    %v1527 = vld [vmem:[#allocation6 + $0x38] sm:$0xf]
    %v1528 = vld [vmem:[#allocation6 + $0x3c] sm:$0xf]
    %v1529 = vld [vmem:[#allocation6 + $0x40] sm:$0xf]
    %v1530 = vld [vmem:[#allocation6 + $0x44] sm:$0xf]
    %v1531 = vld [vmem:[#allocation6 + $0x48] sm:$0xf]
    %v1532 = vld [vmem:[#allocation6 + $0x4c] sm:$0xf]
    %v1533 = vld [vmem:[#allocation6 + $0x50] sm:$0xf]
    %v1534 = vld [vmem:[#allocation6 + $0x54] sm:$0xf]
    %v1535 = vld [vmem:[#allocation6 + $0x58] sm:$0xf]
    %v1536 = vld [vmem:[#allocation6 + $0x5c] sm:$0xf]
    %v1537 = vld [vmem:[#allocation6 + $0x60] sm:$0xf]
    %v1538 = vld [vmem:[#allocation6 + $0x64] sm:$0xf]
    %v1539 = vld [vmem:[#allocation6 + $0x68] sm:$0xf]
    %v1540 = vld [vmem:[#allocation6 + $0x6c] sm:$0xf]
    %v1541 = vld [vmem:[#allocation6 + $0x70] sm:$0xf]
    %v1542 = vld [vmem:[#allocation6 + $0x74] sm:$0xf]
    %v1543 = vld [vmem:[#allocation6 + $0x78] sm:$0xf]
    %v1544 = vld [vmem:[#allocation6 + $0x7c] sm:$0xf]
    %v1545 = vld [vmem:[#allocation6 + $0x80] sm:$0xf]
    %v1546 = vld [vmem:[#allocation6 + $0x84] sm:$0xf]
    %v1547 = vld [vmem:[#allocation6 + $0x88] sm:$0xf]
    %v1548 = vld [vmem:[#allocation6 + $0x8c] sm:$0xf]
    %v1549 = vld [vmem:[#allocation6 + $0x90] sm:$0xf]
    %v1550 = vld [vmem:[#allocation6 + $0x94] sm:$0xf]
    %v1551 = vld [vmem:[#allocation6 + $0x98] sm:$0xf]
    %v1552 = vld [vmem:[#allocation6 + $0x9c] sm:$0xf]
    %v1553 = vld [vmem:[#allocation6 + $0xa0] sm:$0xf]
    %v1554 = vld [vmem:[#allocation6 + $0xa4] sm:$0xf]
    %v1555 = vld [vmem:[#allocation6 + $0xa8] sm:$0xf]
    %v1556 = vld [vmem:[#allocation6 + $0xac] sm:$0xf]
    %v1557 = vld [vmem:[#allocation6 + $0xb0] sm:$0xf]
    %v1558 = vld [vmem:[#allocation6 + $0xb4] sm:$0xf]
    %v1559 = vld [vmem:[#allocation6 + $0xb8] sm:$0xf]
    %v1560 = vld [vmem:[#allocation6 + $0xbc] sm:$0xf]
    %v1561 = vld [vmem:[%s8] sm:$0x1]
    %v1563 = vperm.slane %v1561, 0
    %v1613 = vunpack.c.l.b16 %v1513
    %v1614 = vunpack.c.l.b16 %v1514
    %v1615 = vunpack.c.l.b16 %v1515
    %v1616 = vunpack.c.l.b16 %v1516
    %v1617 = vunpack.c.l.b16 %v1517
    %v1618 = vunpack.c.l.b16 %v1518
    %v1619 = vunpack.c.l.b16 %v1519
    %v1620 = vunpack.c.l.b16 %v1520
    %v1621 = vunpack.c.l.b16 %v1521
    %v1622 = vunpack.c.l.b16 %v1522
    %v1623 = vunpack.c.l.b16 %v1523
    %v1624 = vunpack.c.l.b16 %v1524
    %v1625 = vunpack.c.l.b16 %v1525
    %v1626 = vunpack.c.l.b16 %v1526
    %v1627 = vunpack.c.l.b16 %v1527
    %v1628 = vunpack.c.l.b16 %v1528
    %v1629 = vunpack.c.l.b16 %v1529
    %v1630 = vunpack.c.l.b16 %v1530
    %v1631 = vunpack.c.l.b16 %v1531
    %v1632 = vunpack.c.l.b16 %v1532
    %v1633 = vunpack.c.l.b16 %v1533
    %v1634 = vunpack.c.l.b16 %v1534
    %v1635 = vunpack.c.l.b16 %v1535
    %v1636 = vunpack.c.l.b16 %v1536
    %v1637 = vunpack.c.l.b16 %v1537
    %v1638 = vunpack.c.l.b16 %v1538
    %v1639 = vunpack.c.l.b16 %v1539
    %v1640 = vunpack.c.l.b16 %v1540
    %v1641 = vunpack.c.l.b16 %v1541
    %v1642 = vunpack.c.l.b16 %v1542
    %v1643 = vunpack.c.l.b16 %v1543
    %v1644 = vunpack.c.l.b16 %v1544
    %v1645 = vunpack.c.l.b16 %v1545
    %v1646 = vunpack.c.l.b16 %v1546
    %v1647 = vunpack.c.l.b16 %v1547
    %v1648 = vunpack.c.l.b16 %v1548
    %v1649 = vunpack.c.l.b16 %v1549
    %v1650 = vunpack.c.l.b16 %v1550
    %v1651 = vunpack.c.l.b16 %v1551
    %v1652 = vunpack.c.l.b16 %v1552
    %v1653 = vunpack.c.l.b16 %v1553
    %v1654 = vunpack.c.l.b16 %v1554
    %v1655 = vunpack.c.l.b16 %v1555
    %v1656 = vunpack.c.l.b16 %v1556
    %v1657 = vunpack.c.l.b16 %v1557
    %v1658 = vunpack.c.l.b16 %v1558
    %v1659 = vunpack.c.l.b16 %v1559
    %v1660 = vunpack.c.l.b16 %v1560
    %v1661 = vpack.c.b16 %v1614, %v1613
    %v1662 = vpack.c.b16 %v1616, %v1615
    %v1663 = vpack.c.b16 %v1618, %v1617
    %v1664 = vpack.c.b16 %v1620, %v1619
    %v1665 = vpack.c.b16 %v1622, %v1621
    %v1666 = vpack.c.b16 %v1624, %v1623
    %v1667 = vpack.c.b16 %v1626, %v1625
    %v1668 = vpack.c.b16 %v1628, %v1627
    %v1669 = vpack.c.b16 %v1630, %v1629
    %v1670 = vpack.c.b16 %v1632, %v1631
    %v1671 = vpack.c.b16 %v1634, %v1633
    %v1672 = vpack.c.b16 %v1636, %v1635
    %v1673 = vpack.c.b16 %v1638, %v1637
    %v1674 = vpack.c.b16 %v1640, %v1639
    %v1675 = vpack.c.b16 %v1642, %v1641
    %v1676 = vpack.c.b16 %v1644, %v1643
    %v1677 = vpack.c.b16 %v1646, %v1645
    %v1678 = vpack.c.b16 %v1648, %v1647
    %v1679 = vpack.c.b16 %v1650, %v1649
    %v1680 = vpack.c.b16 %v1652, %v1651
    %v1681 = vpack.c.b16 %v1654, %v1653
    %v1682 = vpack.c.b16 %v1656, %v1655
    %v1683 = vpack.c.b16 %v1658, %v1657
    %v1684 = vpack.c.b16 %v1660, %v1659
    %1709 = vmatpush.bf16.msra.mxu0 %v1668
    %1710 = vmatpush.bf16.msra.mxu0 %v1667
    %1711 = vmatpush.bf16.msra.mxu0 %v1666
    %1712 = vmatpush.bf16.msra.mxu0 %v1665
    %1713 = vmatpush.bf16.msra.mxu0 %v1664
    %1714 = vmatpush.bf16.msra.mxu0 %v1663
    %1715 = vmatpush.bf16.msra.mxu0 %v1662
    %1716 = vmatpush.bf16.msra.mxu0 %v1661
    %1717 = vmatmul.bf16.gmra.mxu0 %v1510
    %v1718 = vpop.f32.mrf.mxu0
    %v1719 = vadd.f32 %v1563, %v1718
    %v1720 = vpop.f32.mrf.mxu0
    %1721 = vdwg.mxu0
    %1722 = vmatpush.bf16.msra.mxu0 %v1676
    %1723 = vmatpush.bf16.msra.mxu0 %v1675
    %1724 = vmatpush.bf16.msra.mxu0 %v1674
    %1725 = vmatpush.bf16.msra.mxu0 %v1673
    %1726 = vmatpush.bf16.msra.mxu0 %v1672
    %1727 = vmatpush.bf16.msra.mxu0 %v1671
    %1728 = vmatpush.bf16.msra.mxu0 %v1670
    %1729 = vmatpush.bf16.msra.mxu0 %v1669
    %1730 = vmatmul.bf16.gmra.mxu0 %v1511
    %v1731 = vpop.f32.mrf.mxu0
    %v1732 = vadd.f32 %v1719, %v1731
    %v1733 = vpop.f32.mrf.mxu0
    %1734 = vdwg.mxu0
    %1735 = vmatpush.bf16.msra.mxu0 %v1684
    %1736 = vmatpush.bf16.msra.mxu0 %v1683
    %1737 = vmatpush.bf16.msra.mxu0 %v1682
    %1738 = vmatpush.bf16.msra.mxu0 %v1681
    %1739 = vmatpush.bf16.msra.mxu0 %v1680
    %1740 = vmatpush.bf16.msra.mxu0 %v1679
    %1741 = vmatpush.bf16.msra.mxu0 %v1678
    %1742 = vmatpush.bf16.msra.mxu0 %v1677
    %1743 = vmatmul.bf16.gmra.mxu0 %v1512
    %v1744 = vpop.f32.mrf.mxu0
    %v1745 = vadd.f32 %v1732, %v1744
    %v1746 = vpop.f32.mrf.mxu0
    %1747 = vdwg.mxu0
    %1748 = vst [vmem:[%s9] sm:$0xff] %v1745
    // Predicated region
    $region50: #{fcnn1d_pallas.1} parent=1 // pred_check
      _
    $region51: #{fcnn1d_pallas.1} parent=1 // pred_check_branch
      %1750 = sbr.rel (0) target = $region53
    $region52: #{fcnn1d_pallas.1} parent=1 // pred_region
      _
    $region53: #{fcnn1d_pallas.1} parent=1 // pred_fallthru
      _
    // Predicated region
    $region54: #{fcnn1d_pallas.1} parent=1 // pred_check
      _
    $region55: #{fcnn1d_pallas.1} parent=1 // pred_check_branch
      %1752 = sbr.rel (0) target = $region57
    $region56: #{fcnn1d_pallas.1} parent=1 // pred_region
      _
    $region57: #{fcnn1d_pallas.1} parent=1 // pred_fallthru
      _
    %1753 = vsyncpa [#allocation3], 1
    %1754 = vsyncpa [#allocation5], 1

</llo_original>
